<compile_context>
chip_gen: v7x
topology: tpu7x:2x2x1
jax: 0.10.0
libtpu: 0.0.40
codegen_flags: <defaults>
</compile_context>

<pallas_src>
import functools
import math

import jax
import jax.numpy as jnp
from jax.experimental import pallas as pl
from jax.experimental.pallas import tpu as pltpu


def _round_up(x, m):
    return (x + m - 1) // m * m


def _vmem_budgets():
    """(per-step working-set budget, vmem_limit_bytes), generation-aware."""
    try:
        cap = pltpu.get_tpu_info().vmem_capacity_bytes
    except Exception:  # no TPU info available -> conservative (v7x-sized)
        cap = 64 * 1024 * 1024
    if cap >= 100 * 1024 * 1024:                  # v5e / v6e: 128 MiB VMEM
        return 28 * 1024 * 1024, 100 * 1024 * 1024
    return 14 * 1024 * 1024, 48 * 1024 * 1024     # v7x: 64 MiB VMEM


def _tile_step(k):
    """tile_h granularity: multiple of 8 (sublanes) and of K-1 (cheap halo)."""
    step = 8
    if k > 1:
        step = step * (k - 1) // math.gcd(step, k - 1)
    return step


def _pick_chunk_h(tile_h, k):
    """Split the tile into 2-4 independent chunks (each >= max(8, K-1) rows)."""
    for n in (4, 3, 2):
        if tile_h % n == 0 and tile_h // n >= max(k - 1, 8):
            return tile_h // n
    return tile_h


def _pick_tile_h(ho, wp, wo_pad, cp, coutp, k, itemsize, budget_bytes):
    """Largest H tile whose per-step working set fits the budget."""
    step = _tile_step(k)
    cap = max(_round_up(ho, step), step)
    cands = sorted({min(_round_up(c, step), cap)
                    for c in (256, 128, 64, 32, 16, 8)}, reverse=True)
    for cand in cands:                                   # biggest first
        chunk = _pick_chunk_h(cand, k)
        in_b = 2 * cand * wp * cp * itemsize             # main block, 2x buffered
        halo_b = 2 * max(k - 1, 0) * wp * cp * itemsize  # halo block, 2x buffered
        out_b = 2 * cand * wo_pad * coutp * itemsize     # output block, 2x buffered
        tmp_b = (k * (chunk + k - 1) * wo_pad * cp * itemsize   # per-kw windows
                 + chunk * wo_pad * (cp + coutp) * 4)           # f32 acc + result
        w_b = 2 * (k * k * cp + cp * coutp) * itemsize
        if in_b + halo_b + out_b + tmp_b + w_b <= budget_bytes:
            return cand
    return step


def _sepconv_kernel(*refs, k, tile_h, wo_pad, chunk_h, mxu_dtype, has_halo):
    """One (batch, H-tile) grid step.

    refs (has_halo=True):  xm, xh, dw, pw, o
    refs (has_halo=False): xm,     dw, pw, o

      xm: (tile_h, Wp, Cp)       main padded-input rows of this tile
      xh: (K-1, Wp, Cp)          rows just below the tile (halo)
      dw: (K, K, Cp)             depthwise weights, channels last
      pw: (Cp, Coutp)            pointwise (1x1) weights, already in mxu_dtype
      o : (tile_h, Wo_pad, Coutp)
    """
    if has_halo:
        xm_ref, xh_ref, dw_ref, pw_ref, o_ref = refs
    else:
        xm_ref, dw_ref, pw_ref, o_ref = refs
        xh_ref = None

    # Hoist weight loads (and the per-tap (Cp,) slices) out of all loops.
    dw = dw_ref[...]
    dw_taps = [[dw[kh, kw, :] for kw in range(k)] for kh in range(k)]
    pw = pw_ref[...]

    n_chunks = tile_h // chunk_h
    for c in range(n_chunks):                    # independent chunks: the VPU
        r0 = c * chunk_h                         # taps of chunk c+1 can overlap
        n_main = min(chunk_h + k - 1, tile_h - r0)   # the MXU matmul of chunk c
        n_halo = (chunk_h + k - 1) - n_main      # > 0 only for the last chunk

        acc = None
        for kw in range(k):
            # One shifted window per kw (K shifts instead of K*K shifted
            # slices); the kh taps below are leading-axis row slices.
            win = xm_ref[r0:r0 + n_main, kw:kw + wo_pad, :]
            if n_halo > 0:
                win = jnp.concatenate(
                    [win, xh_ref[0:n_halo, kw:kw + wo_pad, :]], axis=0)
            for kh in range(k):
                # Multiply in the native dtype, accumulate in f32.
                contrib = (win[kh:kh + chunk_h] * dw_taps[kh][kw]
                           ).astype(jnp.float32)
                acc = contrib if acc is None else acc + contrib

        # Pointwise 1x1 conv == channel matmul on the MXU (f32 accumulation).
        y = jnp.dot(acc.reshape(chunk_h * wo_pad, -1).astype(mxu_dtype), pw,
                    preferred_element_type=jnp.float32)
        o_ref[r0:r0 + chunk_h] = y.reshape(chunk_h, wo_pad, -1
                                           ).astype(o_ref.dtype)


def separable_conv2d(x_nchw, dw_weight, pw_weight, *, stride=1, padding=0,
                     dilation=1, tile_h=None, use_bf16_mxu=True):
    """x_nchw: (N, Cin, H, W); dw_weight: (Cin, 1, K, K) torch depthwise layout;
    pw_weight: (Cout, Cin, 1, 1) torch pointwise layout. Returns (N, Cout, Ho, Wo)."""
    # TODO(synk): stride > 1 / dilation > 1 not implemented in the kernel
    # (Xception's SeparableConv2d uses the defaults stride=1, dilation=1).
    assert stride == 1 and dilation == 1

    n, cin, h, w = x_nchw.shape
    cout = pw_weight.shape[0]
    k = int(dw_weight.shape[2])
    assert dw_weight.shape == (cin, 1, k, k)
    assert pw_weight.shape == (cout, cin, 1, 1)

    ho = h + 2 * padding - k + 1
    wo = w + 2 * padding - k + 1
    assert ho >= 1 and wo >= 1

    dtype = x_nchw.dtype
    itemsize = jnp.dtype(dtype).itemsize
    sub = 8 if itemsize >= 4 else (16 if itemsize == 2 else 32)

    # Sublane-aligned output width (extra zero columns, sliced off below) so
    # the reshapes around the matmul are free and output stores are unmasked.
    wo_pad = _round_up(wo, sub)
    wp = wo_pad + k - 1

    # Lane-dense channels: Cin/Cout padded to multiples of 128.
    # TODO(synk): for Cin << 128 (Xception entry layers) a W-on-lanes layout
    # for the depthwise stage would avoid the up-to-16x channel-padding tax.
    cp = _round_up(cin, 128)
    coutp = _round_up(cout, 128)

    budget_bytes, vmem_limit = _vmem_budgets()
    step = _tile_step(k)
    if tile_h is None:
        tile_h = _pick_tile_h(ho, wp, wo_pad, cp, coutp, k, itemsize,
                              budget_bytes)
    tile_h = max(_round_up(int(tile_h), step), step)
    chunk_h = _pick_chunk_h(tile_h, k)

    n_th = pl.cdiv(ho, tile_h)
    ho_pad = n_th * tile_h
    halo_rows = k - 1
    hp_total = ho_pad + halo_rows        # halo block stays in bounds

    # ---- wrapper glue (plain JAX): NCHW -> NHWC, spatial + channel padding ----
    # TODO(synk): a real Xception stack should keep activations in padded NHWC
    # across layers instead of paying this transpose/pad/slice per call.
    x = jnp.transpose(x_nchw, (0, 2, 3, 1))                      # (N, H, W, Cin)
    x = jnp.pad(x, ((0, 0),
                    (padding, hp_total - h - padding),
                    (padding, wp - w - padding),
                    (0, cp - cin)))                              # (N, Hp, Wp, Cp)
    dw = jnp.transpose(dw_weight[:, 0, :, :], (1, 2, 0))         # (K, K, Cin)
    dw = jnp.pad(dw, ((0, 0), (0, 0), (0, cp - cin))).astype(dtype)

    is_bf16_input = jnp.dtype(dtype) == jnp.dtype(jnp.bfloat16)
    mxu_dtype = jnp.bfloat16 if (use_bf16_mxu or is_bf16_input) else dtype
    pw = jnp.transpose(pw_weight[:, :, 0, 0], (1, 0))            # (Cin, Cout)
    pw = jnp.pad(pw, ((0, cp - cin), (0, coutp - cout))).astype(mxu_dtype)

    has_halo = k > 1
    in_arrays = [x]
    in_specs = [pl.BlockSpec((None, tile_h, wp, cp), lambda b, t: (b, t, 0, 0))]
    if has_halo:
        halo_step = tile_h // (k - 1)    # tile_h is a multiple of K-1 by design
        in_arrays.append(x)              # same array, (K-1)-row halo block
        in_specs.append(
            pl.BlockSpec((None, k - 1, wp, cp),
                         lambda b, t: (b, (t + 1) * halo_step, 0, 0)))
    in_arrays += [dw, pw]
    in_specs += [pl.BlockSpec((k, k, cp), lambda b, t: (0, 0, 0)),
                 pl.BlockSpec((cp, coutp), lambda b, t: (0, 0))]

    kern = functools.partial(_sepconv_kernel, k=k, tile_h=tile_h,
                             wo_pad=wo_pad, chunk_h=chunk_h,
                             mxu_dtype=mxu_dtype, has_halo=has_halo)

    flops = 2 * n * ho_pad * wo_pad * cp * (k * k + coutp)
    bytes_accessed = itemsize * (n * hp_total * wp * cp
                                 + n * ho_pad * wo_pad * coutp
                                 + k * k * cp + cp * coutp)

    out_nhwc = pl.pallas_call(
        kern,
        out_shape=jax.ShapeDtypeStruct((n, ho_pad, wo_pad, coutp), dtype),
        grid_spec=pltpu.PrefetchScalarGridSpec(
            num_scalar_prefetch=0,
            grid=(n, n_th),
            in_specs=in_specs,
            out_specs=pl.BlockSpec((None, tile_h, wo_pad, coutp),
                                   lambda b, t: (b, t, 0, 0)),
        ),
        compiler_params=pltpu.CompilerParams(
            dimension_semantics=("parallel", "parallel"),
            vmem_limit_bytes=vmem_limit,
        ),
        cost_estimate=pl.CostEstimate(flops=flops, transcendentals=0,
                                      bytes_accessed=bytes_accessed),
    )(*in_arrays)

    out = out_nhwc[:, :ho, :wo, :cout]
    return jnp.transpose(out, (0, 3, 1, 2))                      # back to NCHW


def _reference(x_nchw, dw_weight, pw_weight, *, padding):
    """Plain-JAX reference matching nn.Conv2d semantics (f32, full precision)."""
    cin = x_nchw.shape[1]
    y = jax.lax.conv_general_dilated(
        x_nchw, dw_weight, window_strides=(1, 1),
        padding=[(padding, padding), (padding, padding)],
        dimension_numbers=("NCHW", "OIHW", "NCHW"),
        feature_group_count=cin, precision=jax.lax.Precision.HIGHEST)
    y = jax.lax.conv_general_dilated(
        y, pw_weight, window_strides=(1, 1), padding="VALID",
        dimension_numbers=("NCHW", "OIHW", "NCHW"),
        precision=jax.lax.Precision.HIGHEST)
    return y


if __name__ == "__main__":
    key = jax.random.PRNGKey(0)

    # (N, Cin, Cout, H, W, K, P, dtype, tile_h, use_bf16_mxu, atol, rtol)
    configs = [
        (2, 8, 16, 16, 16, 3, 1, jnp.float32, None, False, 2e-3, 2e-3),   # f32 MXU path
        (2, 4, 8, 20, 13, 3, 1, jnp.float32, 8, True, 1e-2, 1e-2),        # multi-tile halo, Wo % 8 != 0
        (1, 16, 32, 12, 12, 1, 0, jnp.float32, None, True, 1e-2, 1e-2),   # K=1: no halo input
        (2, 8, 8, 16, 10, 3, 1, jnp.bfloat16, None, True, 3e-2, 3e-2),    # bf16 activations
    ]
    for idx, (N, Cin, Cout, H, W, K, P, dt, th, bf16mxu,
              atol, rtol) in enumerate(configs):
        key, kx, kd, kp = jax.random.split(key, 4)
        x = jax.random.normal(kx, (N, Cin, H, W), jnp.float32)
        dw_weight = jax.random.normal(kd, (Cin, 1, K, K), jnp.float32) * 0.1
        pw_weight = jax.random.normal(kp, (Cout, Cin, 1, 1), jnp.float32) * 0.1

        out = separable_conv2d(x.astype(dt), dw_weight.astype(dt),
                               pw_weight.astype(dt), stride=1, padding=P,
                               dilation=1, tile_h=th, use_bf16_mxu=bf16mxu)
        out = jax.block_until_ready(out)

        # Reference in f32 on the (possibly bf16-rounded) inputs.
        ref = _reference(x.astype(dt).astype(jnp.float32),
                         dw_weight.astype(dt).astype(jnp.float32),
                         pw_weight.astype(dt).astype(jnp.float32), padding=P)
        Ho = H + 2 * P - K + 1
        Wo = W + 2 * P - K + 1
        assert out.shape == (N, Cout, Ho, Wo), (out.shape, (N, Cout, Ho, Wo))
        out_f32 = out.astype(jnp.float32)
        err = float(jnp.max(jnp.abs(out_f32 - ref)))
        assert jnp.allclose(out_f32, ref, atol=atol, rtol=rtol), (
            f"config {idx}: max abs err {err:.3e}")

    print("KERNEL_OK")
</pallas_src>

<mosaic_0001>
module attributes {stable_mosaic.version = 11 : i64} {
  func.func @_sepconv_kernel(%arg0: i32, %arg1: i32, %arg2: memref<1x16x18x128xf32, #tpu.memory_space<vmem>>, %arg3: memref<1x2x18x128xf32, #tpu.memory_space<vmem>>, %arg4: memref<3x3x128xf32, #tpu.memory_space<vmem>>, %arg5: memref<128x128xf32, #tpu.memory_space<vmem>>, %arg6: memref<1x16x16x128xf32, #tpu.memory_space<vmem>>) attributes {dimension_semantics = [#tpu.dimension_semantics<parallel>, #tpu.dimension_semantics<parallel>], iteration_bounds = array<i64: 2, 1>, scalar_prefetch = 0 : i64, scratch_operands = 0 : i64, tpu.core_type = #tpu.core_type<tc>, window_params = [{transform_indices = @transform_0, window_bounds = array<i64: 1, 16, 18, 128>}, {transform_indices = @transform_1, window_bounds = array<i64: 1, 2, 18, 128>}, {pipeline_mode = #tpu.pipeline_mode<synchronous>, transform_indices = @transform_2, window_bounds = array<i64: 3, 3, 128>}, {pipeline_mode = #tpu.pipeline_mode<synchronous>, transform_indices = @transform_3, window_bounds = array<i64: 128, 128>}, {transform_indices = @transform_4, window_bounds = array<i64: 1, 16, 16, 128>}]} {
    %c0 = arith.constant 0 : index
    %c0_0 = arith.constant 0 : index
    %c0_1 = arith.constant 0 : index
    %0 = vector.load %arg4[%c0, %c0_0, %c0_1] : memref<3x3x128xf32, #tpu.memory_space<vmem>>, vector<3x3x128xf32>
    %1 = vector.extract_strided_slice %0 {offsets = [0, 0, 0], sizes = [1, 1, 128], strides = [1, 1, 1]} : vector<3x3x128xf32> to vector<1x1x128xf32>
    %2 = vector.shape_cast %1 : vector<1x1x128xf32> to vector<128xf32>
    %3 = vector.extract_strided_slice %0 {offsets = [0, 1, 0], sizes = [1, 1, 128], strides = [1, 1, 1]} : vector<3x3x128xf32> to vector<1x1x128xf32>
    %4 = vector.shape_cast %3 : vector<1x1x128xf32> to vector<128xf32>
    %5 = vector.extract_strided_slice %0 {offsets = [0, 2, 0], sizes = [1, 1, 128], strides = [1, 1, 1]} : vector<3x3x128xf32> to vector<1x1x128xf32>
    %6 = vector.shape_cast %5 : vector<1x1x128xf32> to vector<128xf32>
    %7 = vector.extract_strided_slice %0 {offsets = [1, 0, 0], sizes = [1, 1, 128], strides = [1, 1, 1]} : vector<3x3x128xf32> to vector<1x1x128xf32>
    %8 = vector.shape_cast %7 : vector<1x1x128xf32> to vector<128xf32>
    %9 = vector.extract_strided_slice %0 {offsets = [1, 1, 0], sizes = [1, 1, 128], strides = [1, 1, 1]} : vector<3x3x128xf32> to vector<1x1x128xf32>
    %10 = vector.shape_cast %9 : vector<1x1x128xf32> to vector<128xf32>
    %11 = vector.extract_strided_slice %0 {offsets = [1, 2, 0], sizes = [1, 1, 128], strides = [1, 1, 1]} : vector<3x3x128xf32> to vector<1x1x128xf32>
    %12 = vector.shape_cast %11 : vector<1x1x128xf32> to vector<128xf32>
    %13 = vector.extract_strided_slice %0 {offsets = [2, 0, 0], sizes = [1, 1, 128], strides = [1, 1, 1]} : vector<3x3x128xf32> to vector<1x1x128xf32>
    %14 = vector.shape_cast %13 : vector<1x1x128xf32> to vector<128xf32>
    %15 = vector.extract_strided_slice %0 {offsets = [2, 1, 0], sizes = [1, 1, 128], strides = [1, 1, 1]} : vector<3x3x128xf32> to vector<1x1x128xf32>
    %16 = vector.shape_cast %15 : vector<1x1x128xf32> to vector<128xf32>
    %17 = vector.extract_strided_slice %0 {offsets = [2, 2, 0], sizes = [1, 1, 128], strides = [1, 1, 1]} : vector<3x3x128xf32> to vector<1x1x128xf32>
    %18 = vector.shape_cast %17 : vector<1x1x128xf32> to vector<128xf32>
    %c0_2 = arith.constant 0 : index
    %c0_3 = arith.constant 0 : index
    %19 = vector.load %arg5[%c0_2, %c0_3] : memref<128x128xf32, #tpu.memory_space<vmem>>, vector<128x128xf32>
    %c0_4 = arith.constant 0 : index
    %c0_5 = arith.constant 0 : index
    %c0_6 = arith.constant 0 : index
    %c0_7 = arith.constant 0 : index
    %20 = vector.load %arg2[%c0_4, %c0_5, %c0_6, %c0_7] : memref<1x16x18x128xf32, #tpu.memory_space<vmem>>, vector<1x10x16x128xf32>
    %21 = vector.shape_cast %20 : vector<1x10x16x128xf32> to vector<10x16x128xf32>
    %22 = vector.extract_strided_slice %21 {offsets = [0, 0, 0], sizes = [8, 16, 128], strides = [1, 1, 1]} : vector<10x16x128xf32> to vector<8x16x128xf32>
    %23 = vector.shape_cast %2 : vector<128xf32> to vector<1x1x128xf32>
    %24 = vector.broadcast %23 : vector<1x1x128xf32> to vector<8x16x128xf32>
    %25 = arith.mulf %22, %24 : vector<8x16x128xf32>
    %26 = vector.extract_strided_slice %21 {offsets = [1, 0, 0], sizes = [8, 16, 128], strides = [1, 1, 1]} : vector<10x16x128xf32> to vector<8x16x128xf32>
    %27 = vector.shape_cast %8 : vector<128xf32> to vector<1x1x128xf32>
    %28 = vector.broadcast %27 : vector<1x1x128xf32> to vector<8x16x128xf32>
    %29 = arith.mulf %26, %28 : vector<8x16x128xf32>
    %30 = arith.addf %25, %29 : vector<8x16x128xf32>
    %31 = vector.extract_strided_slice %21 {offsets = [2, 0, 0], sizes = [8, 16, 128], strides = [1, 1, 1]} : vector<10x16x128xf32> to vector<8x16x128xf32>
    %32 = vector.shape_cast %14 : vector<128xf32> to vector<1x1x128xf32>
    %33 = vector.broadcast %32 : vector<1x1x128xf32> to vector<8x16x128xf32>
    %34 = arith.mulf %31, %33 : vector<8x16x128xf32>
    %35 = arith.addf %30, %34 : vector<8x16x128xf32>
    %c0_8 = arith.constant 0 : index
    %c0_9 = arith.constant 0 : index
    %c1 = arith.constant 1 : index
    %c0_10 = arith.constant 0 : index
    %36 = vector.load %arg2[%c0_8, %c0_9, %c1, %c0_10] : memref<1x16x18x128xf32, #tpu.memory_space<vmem>>, vector<1x10x16x128xf32>
    %37 = vector.shape_cast %36 : vector<1x10x16x128xf32> to vector<10x16x128xf32>
    %38 = vector.extract_strided_slice %37 {offsets = [0, 0, 0], sizes = [8, 16, 128], strides = [1, 1, 1]} : vector<10x16x128xf32> to vector<8x16x128xf32>
    %39 = vector.shape_cast %4 : vector<128xf32> to vector<1x1x128xf32>
    %40 = vector.broadcast %39 : vector<1x1x128xf32> to vector<8x16x128xf32>
    %41 = arith.mulf %38, %40 : vector<8x16x128xf32>
    %42 = arith.addf %35, %41 : vector<8x16x128xf32>
    %43 = vector.extract_strided_slice %37 {offsets = [1, 0, 0], sizes = [8, 16, 128], strides = [1, 1, 1]} : vector<10x16x128xf32> to vector<8x16x128xf32>
    %44 = vector.shape_cast %10 : vector<128xf32> to vector<1x1x128xf32>
    %45 = vector.broadcast %44 : vector<1x1x128xf32> to vector<8x16x128xf32>
    %46 = arith.mulf %43, %45 : vector<8x16x128xf32>
    %47 = arith.addf %42, %46 : vector<8x16x128xf32>
    %48 = vector.extract_strided_slice %37 {offsets = [2, 0, 0], sizes = [8, 16, 128], strides = [1, 1, 1]} : vector<10x16x128xf32> to vector<8x16x128xf32>
    %49 = vector.shape_cast %16 : vector<128xf32> to vector<1x1x128xf32>
    %50 = vector.broadcast %49 : vector<1x1x128xf32> to vector<8x16x128xf32>
    %51 = arith.mulf %48, %50 : vector<8x16x128xf32>
    %52 = arith.addf %47, %51 : vector<8x16x128xf32>
    %c0_11 = arith.constant 0 : index
    %c0_12 = arith.constant 0 : index
    %c2 = arith.constant 2 : index
    %c0_13 = arith.constant 0 : index
    %53 = vector.load %arg2[%c0_11, %c0_12, %c2, %c0_13] : memref<1x16x18x128xf32, #tpu.memory_space<vmem>>, vector<1x10x16x128xf32>
    %54 = vector.shape_cast %53 : vector<1x10x16x128xf32> to vector<10x16x128xf32>
    %55 = vector.extract_strided_slice %54 {offsets = [0, 0, 0], sizes = [8, 16, 128], strides = [1, 1, 1]} : vector<10x16x128xf32> to vector<8x16x128xf32>
    %56 = vector.shape_cast %6 : vector<128xf32> to vector<1x1x128xf32>
    %57 = vector.broadcast %56 : vector<1x1x128xf32> to vector<8x16x128xf32>
    %58 = arith.mulf %55, %57 : vector<8x16x128xf32>
    %59 = arith.addf %52, %58 : vector<8x16x128xf32>
    %60 = vector.extract_strided_slice %54 {offsets = [1, 0, 0], sizes = [8, 16, 128], strides = [1, 1, 1]} : vector<10x16x128xf32> to vector<8x16x128xf32>
    %61 = vector.shape_cast %12 : vector<128xf32> to vector<1x1x128xf32>
    %62 = vector.broadcast %61 : vector<1x1x128xf32> to vector<8x16x128xf32>
    %63 = arith.mulf %60, %62 : vector<8x16x128xf32>
    %64 = arith.addf %59, %63 : vector<8x16x128xf32>
    %65 = vector.extract_strided_slice %54 {offsets = [2, 0, 0], sizes = [8, 16, 128], strides = [1, 1, 1]} : vector<10x16x128xf32> to vector<8x16x128xf32>
    %66 = vector.shape_cast %18 : vector<128xf32> to vector<1x1x128xf32>
    %67 = vector.broadcast %66 : vector<1x1x128xf32> to vector<8x16x128xf32>
    %68 = arith.mulf %65, %67 : vector<8x16x128xf32>
    %69 = arith.addf %64, %68 : vector<8x16x128xf32>
    %70 = vector.shape_cast %69 : vector<8x16x128xf32> to vector<128x128xf32>
    %cst = arith.constant dense<0.000000e+00> : vector<128x128xf32>
    %71 = tpu.matmul %70, %19, %cst {dimension_numbers = #tpu.dot_dimension_numbers<[1], [0], [0], [1], [0, 0, 1, 1], [], []>} : vector<128x128xf32>, vector<128x128xf32>, vector<128x128xf32> -> vector<128x128xf32>
    %72 = vector.shape_cast %71 : vector<128x128xf32> to vector<8x16x128xf32>
    %c0_14 = arith.constant 0 : index
    %c0_15 = arith.constant 0 : index
    %c0_16 = arith.constant 0 : index
    %c0_17 = arith.constant 0 : index
    %73 = vector.load %arg6[%c0_14, %c0_15, %c0_16, %c0_17] : memref<1x16x16x128xf32, #tpu.memory_space<vmem>>, vector<1x8x16x128xf32>
    %74 = vector.shape_cast %73 : vector<1x8x16x128xf32> to vector<8x16x128xf32>
    %75 = vector.shape_cast %72 : vector<8x16x128xf32> to vector<1x8x16x128xf32>
    tpu.vector_store %arg6[%c0_14, %c0_15, %c0_16, %c0_17], %75 {strides = array<i32>} : memref<1x16x16x128xf32, #tpu.memory_space<vmem>>, vector<1x8x16x128xf32>,
    %c0_18 = arith.constant 0 : index
    %c8 = arith.constant 8 : index
    %c0_19 = arith.constant 0 : index
    %c0_20 = arith.constant 0 : index
    %76 = vector.load %arg2[%c0_18, %c8, %c0_19, %c0_20] : memref<1x16x18x128xf32, #tpu.memory_space<vmem>>, vector<1x8x16x128xf32>
    %77 = vector.shape_cast %76 : vector<1x8x16x128xf32> to vector<8x16x128xf32>
    %c0_21 = arith.constant 0 : index
    %c0_22 = arith.constant 0 : index
    %c0_23 = arith.constant 0 : index
    %c0_24 = arith.constant 0 : index
    %78 = vector.load %arg3[%c0_21, %c0_22, %c0_23, %c0_24] : memref<1x2x18x128xf32, #tpu.memory_space<vmem>>, vector<1x2x16x128xf32>
    %79 = vector.shape_cast %78 : vector<1x2x16x128xf32> to vector<2x16x128xf32>
    %80 = tpu.concatenate %77, %79 in 0 : vector<8x16x128xf32>, vector<2x16x128xf32> -> vector<10x16x128xf32>
    %81 = vector.extract_strided_slice %80 {offsets = [0, 0, 0], sizes = [8, 16, 128], strides = [1, 1, 1]} : vector<10x16x128xf32> to vector<8x16x128xf32>
    %82 = vector.shape_cast %2 : vector<128xf32> to vector<1x1x128xf32>
    %83 = vector.broadcast %82 : vector<1x1x128xf32> to vector<8x16x128xf32>
    %84 = arith.mulf %81, %83 : vector<8x16x128xf32>
    %85 = vector.extract_strided_slice %80 {offsets = [1, 0, 0], sizes = [8, 16, 128], strides = [1, 1, 1]} : vector<10x16x128xf32> to vector<8x16x128xf32>
    %86 = vector.shape_cast %8 : vector<128xf32> to vector<1x1x128xf32>
    %87 = vector.broadcast %86 : vector<1x1x128xf32> to vector<8x16x128xf32>
    %88 = arith.mulf %85, %87 : vector<8x16x128xf32>
    %89 = arith.addf %84, %88 : vector<8x16x128xf32>
    %90 = vector.extract_strided_slice %80 {offsets = [2, 0, 0], sizes = [8, 16, 128], strides = [1, 1, 1]} : vector<10x16x128xf32> to vector<8x16x128xf32>
    %91 = vector.shape_cast %14 : vector<128xf32> to vector<1x1x128xf32>
    %92 = vector.broadcast %91 : vector<1x1x128xf32> to vector<8x16x128xf32>
    %93 = arith.mulf %90, %92 : vector<8x16x128xf32>
    %94 = arith.addf %89, %93 : vector<8x16x128xf32>
    %c0_25 = arith.constant 0 : index
    %c8_26 = arith.constant 8 : index
    %c1_27 = arith.constant 1 : index
    %c0_28 = arith.constant 0 : index
    %95 = vector.load %arg2[%c0_25, %c8_26, %c1_27, %c0_28] : memref<1x16x18x128xf32, #tpu.memory_space<vmem>>, vector<1x8x16x128xf32>
    %96 = vector.shape_cast %95 : vector<1x8x16x128xf32> to vector<8x16x128xf32>
    %c0_29 = arith.constant 0 : index
    %c0_30 = arith.constant 0 : index
    %c1_31 = arith.constant 1 : index
    %c0_32 = arith.constant 0 : index
    %97 = vector.load %arg3[%c0_29, %c0_30, %c1_31, %c0_32] : memref<1x2x18x128xf32, #tpu.memory_space<vmem>>, vector<1x2x16x128xf32>
    %98 = vector.shape_cast %97 : vector<1x2x16x128xf32> to vector<2x16x128xf32>
    %99 = tpu.concatenate %96, %98 in 0 : vector<8x16x128xf32>, vector<2x16x128xf32> -> vector<10x16x128xf32>
    %100 = vector.extract_strided_slice %99 {offsets = [0, 0, 0], sizes = [8, 16, 128], strides = [1, 1, 1]} : vector<10x16x128xf32> to vector<8x16x128xf32>
    %101 = vector.shape_cast %4 : vector<128xf32> to vector<1x1x128xf32>
    %102 = vector.broadcast %101 : vector<1x1x128xf32> to vector<8x16x128xf32>
    %103 = arith.mulf %100, %102 : vector<8x16x128xf32>
    %104 = arith.addf %94, %103 : vector<8x16x128xf32>
    %105 = vector.extract_strided_slice %99 {offsets = [1, 0, 0], sizes = [8, 16, 128], strides = [1, 1, 1]} : vector<10x16x128xf32> to vector<8x16x128xf32>
    %106 = vector.shape_cast %10 : vector<128xf32> to vector<1x1x128xf32>
    %107 = vector.broadcast %106 : vector<1x1x128xf32> to vector<8x16x128xf32>
    %108 = arith.mulf %105, %107 : vector<8x16x128xf32>
    %109 = arith.addf %104, %108 : vector<8x16x128xf32>
    %110 = vector.extract_strided_slice %99 {offsets = [2, 0, 0], sizes = [8, 16, 128], strides = [1, 1, 1]} : vector<10x16x128xf32> to vector<8x16x128xf32>
    %111 = vector.shape_cast %16 : vector<128xf32> to vector<1x1x128xf32>
    %112 = vector.broadcast %111 : vector<1x1x128xf32> to vector<8x16x128xf32>
    %113 = arith.mulf %110, %112 : vector<8x16x128xf32>
    %114 = arith.addf %109, %113 : vector<8x16x128xf32>
    %c0_33 = arith.constant 0 : index
    %c8_34 = arith.constant 8 : index
    %c2_35 = arith.constant 2 : index
    %c0_36 = arith.constant 0 : index
    %115 = vector.load %arg2[%c0_33, %c8_34, %c2_35, %c0_36] : memref<1x16x18x128xf32, #tpu.memory_space<vmem>>, vector<1x8x16x128xf32>
    %116 = vector.shape_cast %115 : vector<1x8x16x128xf32> to vector<8x16x128xf32>
    %c0_37 = arith.constant 0 : index
    %c0_38 = arith.constant 0 : index
    %c2_39 = arith.constant 2 : index
    %c0_40 = arith.constant 0 : index
    %117 = vector.load %arg3[%c0_37, %c0_38, %c2_39, %c0_40] : memref<1x2x18x128xf32, #tpu.memory_space<vmem>>, vector<1x2x16x128xf32>
    %118 = vector.shape_cast %117 : vector<1x2x16x128xf32> to vector<2x16x128xf32>
    %119 = tpu.concatenate %116, %118 in 0 : vector<8x16x128xf32>, vector<2x16x128xf32> -> vector<10x16x128xf32>
    %120 = vector.extract_strided_slice %119 {offsets = [0, 0, 0], sizes = [8, 16, 128], strides = [1, 1, 1]} : vector<10x16x128xf32> to vector<8x16x128xf32>
    %121 = vector.shape_cast %6 : vector<128xf32> to vector<1x1x128xf32>
    %122 = vector.broadcast %121 : vector<1x1x128xf32> to vector<8x16x128xf32>
    %123 = arith.mulf %120, %122 : vector<8x16x128xf32>
    %124 = arith.addf %114, %123 : vector<8x16x128xf32>
    %125 = vector.extract_strided_slice %119 {offsets = [1, 0, 0], sizes = [8, 16, 128], strides = [1, 1, 1]} : vector<10x16x128xf32> to vector<8x16x128xf32>
    %126 = vector.shape_cast %12 : vector<128xf32> to vector<1x1x128xf32>
    %127 = vector.broadcast %126 : vector<1x1x128xf32> to vector<8x16x128xf32>
    %128 = arith.mulf %125, %127 : vector<8x16x128xf32>
    %129 = arith.addf %124, %128 : vector<8x16x128xf32>
    %130 = vector.extract_strided_slice %119 {offsets = [2, 0, 0], sizes = [8, 16, 128], strides = [1, 1, 1]} : vector<10x16x128xf32> to vector<8x16x128xf32>
    %131 = vector.shape_cast %18 : vector<128xf32> to vector<1x1x128xf32>
    %132 = vector.broadcast %131 : vector<1x1x128xf32> to vector<8x16x128xf32>
    %133 = arith.mulf %130, %132 : vector<8x16x128xf32>
    %134 = arith.addf %129, %133 : vector<8x16x128xf32>
    %135 = vector.shape_cast %134 : vector<8x16x128xf32> to vector<128x128xf32>
    %cst_41 = arith.constant dense<0.000000e+00> : vector<128x128xf32>
    %136 = tpu.matmul %135, %19, %cst_41 {dimension_numbers = #tpu.dot_dimension_numbers<[1], [0], [0], [1], [0, 0, 1, 1], [], []>} : vector<128x128xf32>, vector<128x128xf32>, vector<128x128xf32> -> vector<128x128xf32>
    %137 = vector.shape_cast %136 : vector<128x128xf32> to vector<8x16x128xf32>
    %c0_42 = arith.constant 0 : index
    %c8_43 = arith.constant 8 : index
    %c0_44 = arith.constant 0 : index
    %c0_45 = arith.constant 0 : index
    %138 = vector.load %arg6[%c0_42, %c8_43, %c0_44, %c0_45] : memref<1x16x16x128xf32, #tpu.memory_space<vmem>>, vector<1x8x16x128xf32>
    %139 = vector.shape_cast %138 : vector<1x8x16x128xf32> to vector<8x16x128xf32>
    %140 = vector.shape_cast %137 : vector<8x16x128xf32> to vector<1x8x16x128xf32>
    tpu.vector_store %arg6[%c0_42, %c8_43, %c0_44, %c0_45], %140 {strides = array<i32>} : memref<1x16x16x128xf32, #tpu.memory_space<vmem>>, vector<1x8x16x128xf32>,
    return
  }
  func.func @transform_0(%arg0: i32, %arg1: i32) -> (i32, i32, i32, i32) {
    %c0_i32 = arith.constant 0 : i32
    %c0_i32_0 = arith.constant 0 : i32
    %c0_i32_1 = arith.constant 0 : i32
    return %arg0, %arg1, %c0_i32, %c0_i32_0 : i32, i32, i32, i32
  }
  func.func @transform_1(%arg0: i32, %arg1: i32) -> (i32, i32, i32, i32) {
    %c1_i32 = arith.constant 1 : i32
    %0 = arith.addi %arg1, %c1_i32 : i32
    %c8_i32 = arith.constant 8 : i32
    %1 = arith.muli %0, %c8_i32 : i32
    %c0_i32 = arith.constant 0 : i32
    %c0_i32_0 = arith.constant 0 : i32
    %c0_i32_1 = arith.constant 0 : i32
    return %arg0, %1, %c0_i32, %c0_i32_0 : i32, i32, i32, i32
  }
  func.func @transform_2(%arg0: i32, %arg1: i32) -> (i32, i32, i32) {
    %c0_i32 = arith.constant 0 : i32
    %c0_i32_0 = arith.constant 0 : i32
    %c0_i32_1 = arith.constant 0 : i32
    %c0_i32_2 = arith.constant 0 : i32
    return %c0_i32, %c0_i32_0, %c0_i32_1 : i32, i32, i32
  }
  func.func @transform_3(%arg0: i32, %arg1: i32) -> (i32, i32) {
    %c0_i32 = arith.constant 0 : i32
    %c0_i32_0 = arith.constant 0 : i32
    %c0_i32_1 = arith.constant 0 : i32
    return %c0_i32, %c0_i32_0 : i32, i32
  }
  func.func @transform_4(%arg0: i32, %arg1: i32) -> (i32, i32, i32, i32) {
    %c0_i32 = arith.constant 0 : i32
    %c0_i32_0 = arith.constant 0 : i32
    %c0_i32_1 = arith.constant 0 : i32
    return %arg0, %arg1, %c0_i32, %c0_i32_0 : i32, i32, i32, i32
  }
}

</mosaic_0001>

<llo_original>
// kernel: tpu_custom_call.1
$region0: #{tpu_custom_call.1}
  #allocation0 [shape = 'u32[]', space=smem, size = 0x4, offset = 0x4, fixed_abs, tag = 'smem constant byte address 0x4 - core index']
  #allocation1 [shape = 'u32[144,128]{1,0:T(1,128)}', space=vmem, size = 0x12000, scoped, tag = 'internal scratch']
  %s0 = inlined_call_operand.vmem [shape: f32[2,18,18,128], index: 0, kind: input, shape index: {}]
  %s1 = inlined_call_operand.vmem [shape: f32[2,18,18,128], index: 1, kind: input, shape index: {}]
  %s2 = inlined_call_operand.vmem [shape: f32[3,3,128], index: 2, kind: input, shape index: {}]
  %s3 = inlined_call_operand.vmem [shape: f32[128,128], index: 3, kind: input, shape index: {}]
  %s4 = inlined_call_operand.hbm [shape: f32[2,16,16,128], index: 4, kind: output, shape index: {}]
  %s5 = sld [smem:[#allocation0]]
  $region49: #{tpu_custom_call.1} parent=0
    _
  %s7 = ssub.s32 1, %s5
  %s8 = scalar_select 0, %s7, %s5
  $region1: #{tpu_custom_call.1} parent=0
    #allocation2 [shape = 'u8[262144]{0}', space=vmem, size = 0x40000, scoped, tag = 'output window, operand 0']
    #allocation3 [shape = 's32[2]{0}', space=sflag, size = 0x8, scoped, tag = 'scoped memory for tpu_custom_call.1']
    %9 = vsyncpa [#allocation3], 0
    %s10 = scalar_lea.sflag [#allocation3], 1
    %11 = vsyncpa %s10, 0
    loop: start=0, step=1, limit=4
    $region2: #{tpu_custom_call.1} parent=1 // loop_pre_header
      _
    $region3: #{tpu_custom_call.1} parent=1 // loop_header
      %s13 = sphi 0, %s17
      %p14 = scmp.ge.s32.totalorder %s13, 4
      %s20 = sphi 0, %s32
      %s21 = sphi 0, %s28
      %s22 = sphi 0, %s20
      %s23 = sphi 0, %s21
      %s24 = sphi 0, %s22
      %s25 = sphi 0, %s23
      %s37 = sphi 0, %s39
      %s40 = sphi 0, %s37
      %s41 = sphi 0, %s40
      %s57 = sphi 0, %s41
      %s69 = sphi 0, %s71
      %s72 = sphi 0, %s69
      %s73 = sphi 0, %s72
      %s89 = sphi 0, %s73
      %s93 = sphi 0, %s93
      %s95 = sphi 0, %s93
      %s96 = sphi 0, %s95
      %s110 = sphi 0, %s96
      %s114 = sphi 0, %s114
      %s116 = sphi 0, %s114
      %s117 = sphi 0, %s116
      %s131 = sphi 0, %s117
      %s139 = sphi 0, %s141
      %s142 = sphi 0, %s139
      %s143 = sphi 0, %s142
      %s159 = sphi 0, %s143
    $region4: #{tpu_custom_call.1} parent=1 // loop_header_branch
      %16 = sbr.rel (%p14) target = $region8
    $region5: #{tpu_custom_call.1} parent=1 // loop_body
      %s18 = ssub.s32 %s13, 1
      %s19 = ssub.s32 %s13, 2
      %s26 = sadd.s32 1, %s21
      %p27 = scmp.ge.s32.totalorder %s26, 1
      %s28 = scalar_select %p27, 0, %s26
      %s29 = sadd.s32 1, %s20
      %s30 = scalar_select %p27, %s29, %s20
      %p31 = scmp.ge.s32.totalorder %s30, 2
      %s32 = scalar_select %p31, 0, %s30
      %s33 = ssub.s32 %s20, %s32
      %s34 = ssub.s32 %s21, %s28
      %s35 = sor.u32 %s33, %s34
      %p36 = scmp.eq.s32.totalorder %s35, 0
      %s38 = sadd.s32 %s37, 1
      %s39 = scalar_select %p36, %s37, %s38
      %p42 = pneg %p36
      %p43 = scmp.eq.s32.totalorder %s13, 1
      %p44 = por %p42, %p43
      %p45 = scmp.ne.s32.totalorder %s37, %s40
      %p46 = scmp.eq.s32.totalorder %s13, 0
      %p47 = por %p45, %p46
      %p48 = scmp.ne.s32.totalorder %s37, %s40
      %p49 = scmp.eq.s32.totalorder %s18, 1
      %p50 = por %p48, %p49
      %p51 = scmp.ne.s32.totalorder %s40, %s41
      %p52 = scmp.eq.s32.totalorder %s18, 0
      %p53 = por %p51, %p52
      %p54 = scmp.ne.s32.totalorder %s40, %s41
      %p55 = scmp.eq.s32.totalorder %s19, 1
      %p56 = por %p54, %p55
      %p58 = scmp.ne.s32.totalorder %s41, %s57
      %p59 = scmp.eq.s32.totalorder %s19, 0
      %p60 = por %p58, %p59
      %s61 = sadd.s32 %s21, 1
      %s62 = smul.u32 %s61, 8
      %s63 = sadd.s32 %s28, 1
      %s64 = smul.u32 %s63, 8
      %s65 = ssub.s32 %s20, %s32
      %s66 = ssub.s32 %s62, %s64
      %s67 = sor.u32 %s65, %s66
      %p68 = scmp.eq.s32.totalorder %s67, 0
      %s70 = sadd.s32 %s69, 1
      %s71 = scalar_select %p68, %s69, %s70
      %p74 = pneg %p68
      %p75 = scmp.eq.s32.totalorder %s13, 1
      %p76 = por %p74, %p75
      %p77 = scmp.ne.s32.totalorder %s69, %s72
      %p78 = scmp.eq.s32.totalorder %s13, 0
      %p79 = por %p77, %p78
      %p80 = scmp.ne.s32.totalorder %s69, %s72
      %p81 = scmp.eq.s32.totalorder %s18, 1
      %p82 = por %p80, %p81
      %p83 = scmp.ne.s32.totalorder %s72, %s73
      %p84 = scmp.eq.s32.totalorder %s18, 0
      %p85 = por %p83, %p84
      %p86 = scmp.ne.s32.totalorder %s72, %s73
      %p87 = scmp.eq.s32.totalorder %s19, 1
      %p88 = por %p86, %p87
      %p90 = scmp.ne.s32.totalorder %s73, %s89
      %p91 = scmp.eq.s32.totalorder %s19, 0
      %p92 = por %p90, %p91
      %s94 = sadd.s32 %s93, 1
      %p97 = scmp.eq.s32.totalorder %s13, 1
      %p98 = scmp.ne.s32.totalorder %s93, %s95
      %p99 = scmp.eq.s32.totalorder %s13, 0
      %p100 = por %p98, %p99
      %p101 = scmp.ne.s32.totalorder %s93, %s95
      %p102 = scmp.eq.s32.totalorder %s18, 1
      %p103 = por %p101, %p102
      %p104 = scmp.ne.s32.totalorder %s95, %s96
      %p105 = scmp.eq.s32.totalorder %s18, 0
      %p106 = por %p104, %p105
      %p107 = scmp.ne.s32.totalorder %s95, %s96
      %p108 = scmp.eq.s32.totalorder %s19, 1
      %p109 = por %p107, %p108
      %p111 = scmp.ne.s32.totalorder %s96, %s110
      %p112 = scmp.eq.s32.totalorder %s19, 0
      %p113 = por %p111, %p112
      %s115 = sadd.s32 %s114, 1
      %p118 = scmp.eq.s32.totalorder %s13, 1
      %p119 = scmp.ne.s32.totalorder %s114, %s116
      %p120 = scmp.eq.s32.totalorder %s13, 0
      %p121 = por %p119, %p120
      %p122 = scmp.ne.s32.totalorder %s114, %s116
      %p123 = scmp.eq.s32.totalorder %s18, 1
      %p124 = por %p122, %p123
      %p125 = scmp.ne.s32.totalorder %s116, %s117
      %p126 = scmp.eq.s32.totalorder %s18, 0
      %p127 = por %p125, %p126
      %p128 = scmp.ne.s32.totalorder %s116, %s117
      %p129 = scmp.eq.s32.totalorder %s19, 1
      %p130 = por %p128, %p129
      %p132 = scmp.ne.s32.totalorder %s117, %s131
      %p133 = scmp.eq.s32.totalorder %s19, 0
      %p134 = por %p132, %p133
      %s135 = ssub.s32 %s20, %s32
      %s136 = ssub.s32 %s21, %s28
      %s137 = sor.u32 %s135, %s136
      %p138 = scmp.eq.s32.totalorder %s137, 0
      %s140 = sadd.s32 %s139, 1
      %s141 = scalar_select %p138, %s139, %s140
      %p144 = pneg %p138
      %p145 = scmp.eq.s32.totalorder %s13, 1
      %p146 = por %p144, %p145
      %p147 = scmp.ne.s32.totalorder %s139, %s142
      %p148 = scmp.eq.s32.totalorder %s13, 0
      %p149 = por %p147, %p148
      %p150 = scmp.ne.s32.totalorder %s139, %s142
      %p151 = scmp.eq.s32.totalorder %s18, 1
      %p152 = por %p150, %p151
      %p153 = scmp.ne.s32.totalorder %s142, %s143
      %p154 = scmp.eq.s32.totalorder %s18, 0
      %p155 = por %p153, %p154
      %p156 = scmp.ne.s32.totalorder %s142, %s143
      %p157 = scmp.eq.s32.totalorder %s19, 1
      %p158 = por %p156, %p157
      %p160 = scmp.ne.s32.totalorder %s143, %s159
      %p161 = scmp.eq.s32.totalorder %s19, 0
      %p162 = por %p160, %p161
      %p163 = scmp.le.s32.totalorder 1, %s13
      %p164 = scmp.lt.s32.totalorder %s13, 3
      %p165 = pnand %p163, %p164
      %p166 = pneg %p165
      // Predicated region
      $region9: #{tpu_custom_call.1} parent=5 // pred_check
        _
      $region10: #{tpu_custom_call.1} parent=5 // pred_check_branch
        %168 = sbr.rel (%p165) target = $region12
      $region11: #{tpu_custom_call.1} parent=5 // pred_region
        %s169 = ssub.s32 %s13, 1
        // Predicated region
        $region13: #{tpu_custom_call.1} parent=11 // pred_check
          %p170 = pneg %p106
        $region14: #{tpu_custom_call.1} parent=11 // pred_check_branch
          %172 = sbr.rel (%p170) target = $region16
        $region15: #{tpu_custom_call.1} parent=11 // pred_region
          _
        $region16: #{tpu_custom_call.1} parent=11 // pred_fallthru
          _
        // Predicated region
        $region17: #{tpu_custom_call.1} parent=11 // pred_check
          %p173 = pneg %p127
        $region18: #{tpu_custom_call.1} parent=11 // pred_check_branch
          %175 = sbr.rel (%p173) target = $region20
        $region19: #{tpu_custom_call.1} parent=11 // pred_region
          _
        $region20: #{tpu_custom_call.1} parent=11 // pred_fallthru
          _
      $region12: #{tpu_custom_call.1} parent=5 // pred_fallthru
        _
      %p176 = scmp.lt.s32.totalorder %s13, 2
      // Predicated region
      $region21: #{tpu_custom_call.1} parent=5 // pred_check
        %p177 = pneg %p176
      $region22: #{tpu_custom_call.1} parent=5 // pred_check_branch
        %179 = sbr.rel (%p177) target = $region24
      $region23: #{tpu_custom_call.1} parent=5 // pred_region
        // Predicated region
        $region25: #{tpu_custom_call.1} parent=23 // pred_check
          %p180 = pneg %p47
        $region26: #{tpu_custom_call.1} parent=23 // pred_check_branch
          %182 = sbr.rel (%p180) target = $region28
        $region27: #{tpu_custom_call.1} parent=23 // pred_region
          %s183 = smul.u32 16, %s21
          %s184 = ssub.s32 18, %s183
          %p185 = scmp.lt.s32.totalorder %s184, 16
          %s186 = scalar_select %p185, %s184, 16
          %s187 = smul.u32 128, %s186
          %s188 = smul.u32 %s187, 3
          %p189 = scmp.lt.s32.totalorder %s20, 1
          %s190 = scalar_select %p189, %s20, 1
          %p191 = scmp.lt.s32.totalorder %s183, 17
          %s192 = scalar_select %p191, %s183, 17
          %s193 = smul.addr %s192, 3
          %s194 = smul.addr %s190, 54
          %s195 = sadd.s32 %s193, %s194
          %s196 = smul.addr %s195, 8
          %s197 = scalar_lea.vmem %s0, %s196
          %s198 = smul.u32 16, %s21
          %s199 = ssub.s32 18, %s198
          %p200 = scmp.lt.s32.totalorder %s199, 16
          %s201 = scalar_select %p200, %s199, 16
          %s202 = smul.u32 128, %s201
          %s203 = smul.u32 %s202, 3
        $region28: #{tpu_custom_call.1} parent=23 // pred_fallthru
          _
        // Predicated region
        $region29: #{tpu_custom_call.1} parent=23 // pred_check
          %p204 = pneg %p79
        $region30: #{tpu_custom_call.1} parent=23 // pred_check_branch
          %206 = sbr.rel (%p204) target = $region32
        $region31: #{tpu_custom_call.1} parent=23 // pred_region
          %s207 = sadd.s32 %s21, 1
          %s208 = smul.u32 %s207, 8
          %s209 = smul.u32 2, %s208
          %p210 = scmp.lt.s32.totalorder %s20, 1
          %s211 = scalar_select %p210, %s20, 1
          %p212 = scmp.lt.s32.totalorder %s209, 17
          %s213 = scalar_select %p212, %s209, 17
          %s214 = smul.addr %s213, 3
          %s215 = smul.addr %s211, 54
          %s216 = sadd.s32 %s214, %s215
          %s217 = smul.addr %s216, 8
          %s218 = scalar_lea.vmem %s1, %s217
          %s219 = sadd.s32 %s21, 1
          %s220 = smul.u32 %s219, 8
          %s221 = smul.u32 2, %s220
        $region32: #{tpu_custom_call.1} parent=23 // pred_fallthru
          _
      $region24: #{tpu_custom_call.1} parent=5 // pred_fallthru
        _
      %p222 = scmp.le.s32.totalorder 1, %s13
      %p223 = scmp.lt.s32.totalorder %s13, 3
      %p224 = pnand %p222, %p223
      %p225 = pneg %p224
      // Predicated region
      $region33: #{tpu_custom_call.1} parent=5 // pred_check
        _
      $region34: #{tpu_custom_call.1} parent=5 // pred_check_branch
        %227 = sbr.rel (%p224) target = $region36
      $region35: #{tpu_custom_call.1} parent=5 // pred_region
        %s228 = ssub.s32 %s13, 1
        %s229 = smul.u32 16, %s23
        %s230 = ssub.s32 18, %s229
        %p231 = scmp.lt.s32.totalorder %s230, 16
        %s232 = scalar_select %p231, %s230, 16
        %s233 = smul.u32 128, %s232
        %s234 = smul.u32 %s233, 3
        %p235 = scmp.lt.s32.totalorder %s22, 1
        %s236 = scalar_select %p235, %s22, 1
        %p237 = scmp.lt.s32.totalorder %s229, 17
        %s238 = scalar_select %p237, %s229, 17
        %s239 = smul.addr %s238, 3
        %s240 = smul.addr %s236, 54
        %s241 = sadd.s32 %s239, %s240
        %s242 = smul.addr %s241, 8
        %s243 = scalar_lea.vmem %s0, %s242
        %p244 = pneg %p53
        %p245 = pneg %p50
        %s246 = sadd.s32 %s23, 1
        %s247 = smul.u32 %s246, 8
        %s248 = smul.u32 2, %s247
        %p249 = scmp.lt.s32.totalorder %s22, 1
        %s250 = scalar_select %p249, %s22, 1
        %p251 = scmp.lt.s32.totalorder %s248, 17
        %s252 = scalar_select %p251, %s248, 17
        %s253 = smul.addr %s252, 3
        %s254 = smul.addr %s250, 54
        %s255 = sadd.s32 %s253, %s254
        %s256 = smul.addr %s255, 8
        %s257 = scalar_lea.vmem %s1, %s256
        %p258 = pneg %p85
        %p259 = pneg %p82
        %p260 = pneg %p106
        %p261 = pneg %p103
        %p262 = pneg %p127
        %p263 = pneg %p124
        %p264 = pneg %p155
        %p265 = pneg %p152
        %s266 = sand.u32 %s142, 1
        %s267 = scalar_lea.sflag [#allocation3], %s266
        %s268 = sand.u32 %s142, 1
        %s269 = smul.addr %s268, 256
        %s270 = scalar_lea.vmem [#allocation2], %s269
        %s271 = smul.u32 16, %s23
        %s272 = ssub.s32 18, %s271
        %p273 = scmp.lt.s32.totalorder %s272, 16
        %s274 = scalar_select %p273, %s272, 16
        %s275 = smul.u32 128, %s274
        %s276 = smul.u32 %s275, 3
        %p277 = scmp.lt.s32.totalorder %s22, 1
        %s278 = scalar_select %p277, %s22, 1
        %p279 = scmp.lt.s32.totalorder %s271, 17
        %s280 = scalar_select %p279, %s271, 17
        %s281 = smul.addr %s280, 3
        %s282 = smul.addr %s278, 54
        %s283 = sadd.s32 %s281, %s282
        %s284 = smul.addr %s283, 8
        %s285 = scalar_lea.vmem %s0, %s284
        %s286 = smul.u32 16, %s23
        %s287 = ssub.s32 18, %s286
        %p288 = scmp.lt.s32.totalorder %s287, 16
        %s289 = scalar_select %p288, %s287, 16
        %s290 = smul.u32 128, %s289
        %s291 = smul.u32 %s290, 3
        %s292 = sadd.s32 %s23, 1
        %s293 = smul.u32 %s292, 8
        %s294 = smul.u32 2, %s293
        %p295 = scmp.lt.s32.totalorder %s22, 1
        %s296 = scalar_select %p295, %s22, 1
        %p297 = scmp.lt.s32.totalorder %s294, 17
        %s298 = scalar_select %p297, %s294, 17
        %s299 = smul.addr %s298, 3
        %s300 = smul.addr %s296, 54
        %s301 = sadd.s32 %s299, %s300
        %s302 = smul.addr %s301, 8
        %s303 = scalar_lea.vmem %s1, %s302
        %s304 = sadd.s32 %s23, 1
        %s305 = smul.u32 %s304, 8
        %s306 = smul.u32 2, %s305
        %s307 = smul.u32 16, %s23
        %v308 = vld [vmem:[%s2] sm:$0x7]
        %v309 = vld [vmem:[%s2 + $0x4] sm:$0x7]
        %v310 = vld [vmem:[%s2 + $0x8] sm:$0x7]
        %v311 = vld [vmem:[%s3] sm:$0xff]
        %v312 = vld [vmem:[%s3 + $0x8] sm:$0xff]
        %v313 = vld [vmem:[%s3 + $0x10] sm:$0xff]
        %v314 = vld [vmem:[%s3 + $0x18] sm:$0xff]
        %v315 = vld [vmem:[%s3 + $0x20] sm:$0xff]
        %v316 = vld [vmem:[%s3 + $0x28] sm:$0xff]
        %v317 = vld [vmem:[%s3 + $0x30] sm:$0xff]
        %v318 = vld [vmem:[%s3 + $0x38] sm:$0xff]
        %v319 = vld [vmem:[%s3 + $0x40] sm:$0xff]
        %v320 = vld [vmem:[%s3 + $0x48] sm:$0xff]
        %v321 = vld [vmem:[%s3 + $0x50] sm:$0xff]
        %v322 = vld [vmem:[%s3 + $0x58] sm:$0xff]
        %v323 = vld [vmem:[%s3 + $0x60] sm:$0xff]
        %v324 = vld [vmem:[%s3 + $0x68] sm:$0xff]
        %v325 = vld [vmem:[%s3 + $0x70] sm:$0xff]
        %v326 = vld [vmem:[%s3 + $0x78] sm:$0xff]
        %v327 = vld [vmem:[%s285] sm:$0xff]
        %v328 = vld [vmem:[%s285 + $0x8] sm:$0xff]
        %v329 = vld [vmem:[%s285 + $0x18] sm:$0xff]
        %v330 = vld [vmem:[%s285 + $0x20] sm:$0xff]
        %v331 = vld [vmem:[%s285 + $0x30] sm:$0xff]
        %v332 = vld [vmem:[%s285 + $0x38] sm:$0xff]
        %v333 = vld [vmem:[%s285 + $0x48] sm:$0xff]
        %v334 = vld [vmem:[%s285 + $0x50] sm:$0xff]
        %v335 = vld [vmem:[%s285 + $0x60] sm:$0xff]
        %v336 = vld [vmem:[%s285 + $0x68] sm:$0xff]
        %v337 = vld [vmem:[%s285 + $0x78] sm:$0xff]
        %v338 = vld [vmem:[%s285 + $0x80] sm:$0xff]
        %v339 = vld [vmem:[%s285 + $0x90] sm:$0xff]
        %v340 = vld [vmem:[%s285 + $0x98] sm:$0xff]
        %v341 = vld [vmem:[%s285 + $0xa8] sm:$0xff]
        %v342 = vld [vmem:[%s285 + $0xb0] sm:$0xff]
        %v343 = vld [vmem:[%s285 + $0xc0] sm:$0xff]
        %v344 = vld [vmem:[%s285 + $0xc8] sm:$0xff]
        %v345 = vld [vmem:[%s285 + $0xd8] sm:$0xff]
        %v346 = vld [vmem:[%s285 + $0xe0] sm:$0xff]
        %v347 = vlaneseq
        %v348 = vshrl.u32 %v347, 7
        %v349 = vsub.s32 0, %v348
        %v350 = vrot.slane %v308, %v349
        %v351 = vmul.f32 %v327, %v350
        %v352 = vmul.f32 %v328, %v350
        %v353 = vmul.f32 %v329, %v350
        %v354 = vmul.f32 %v330, %v350
        %v355 = vmul.f32 %v331, %v350
        %v356 = vmul.f32 %v332, %v350
        %v357 = vmul.f32 %v333, %v350
        %v358 = vmul.f32 %v334, %v350
        %v359 = vmul.f32 %v335, %v350
        %v360 = vmul.f32 %v336, %v350
        %v361 = vmul.f32 %v337, %v350
        %v362 = vmul.f32 %v338, %v350
        %v363 = vmul.f32 %v339, %v350
        %v364 = vmul.f32 %v340, %v350
        %v365 = vmul.f32 %v341, %v350
        %v366 = vmul.f32 %v342, %v350
        %v367 = vlaneseq
        %v368 = vshrl.u32 %v367, 7
        %v369 = vsub.s32 0, %v368
        %v370 = vrot.slane %v309, %v369
        %v371 = vmul.f32 %v329, %v370
        %v372 = vmul.f32 %v330, %v370
        %v373 = vmul.f32 %v331, %v370
        %v374 = vmul.f32 %v332, %v370
        %v375 = vmul.f32 %v333, %v370
        %v376 = vmul.f32 %v334, %v370
        %v377 = vmul.f32 %v335, %v370
        %v378 = vmul.f32 %v336, %v370
        %v379 = vmul.f32 %v337, %v370
        %v380 = vmul.f32 %v338, %v370
        %v381 = vmul.f32 %v339, %v370
        %v382 = vmul.f32 %v340, %v370
        %v383 = vmul.f32 %v341, %v370
        %v384 = vmul.f32 %v342, %v370
        %v385 = vmul.f32 %v343, %v370
        %v386 = vmul.f32 %v344, %v370
        %v387 = vadd.f32 %v351, %v371
        %v388 = vadd.f32 %v352, %v372
        %v389 = vadd.f32 %v353, %v373
        %v390 = vadd.f32 %v354, %v374
        %v391 = vadd.f32 %v355, %v375
        %v392 = vadd.f32 %v356, %v376
        %v393 = vadd.f32 %v357, %v377
        %v394 = vadd.f32 %v358, %v378
        %v395 = vadd.f32 %v359, %v379
        %v396 = vadd.f32 %v360, %v380
        %v397 = vadd.f32 %v361, %v381
        %v398 = vadd.f32 %v362, %v382
        %v399 = vadd.f32 %v363, %v383
        %v400 = vadd.f32 %v364, %v384
        %v401 = vadd.f32 %v365, %v385
        %v402 = vadd.f32 %v366, %v386
        %v403 = vlaneseq
        %v404 = vshrl.u32 %v403, 7
        %v405 = vsub.s32 0, %v404
        %v406 = vrot.slane %v310, %v405
        %v407 = vmul.f32 %v331, %v406
        %v408 = vmul.f32 %v332, %v406
        %v409 = vmul.f32 %v333, %v406
        %v410 = vmul.f32 %v334, %v406
        %v411 = vmul.f32 %v335, %v406
        %v412 = vmul.f32 %v336, %v406
        %v413 = vmul.f32 %v337, %v406
        %v414 = vmul.f32 %v338, %v406
        %v415 = vmul.f32 %v339, %v406
        %v416 = vmul.f32 %v340, %v406
        %v417 = vmul.f32 %v341, %v406
        %v418 = vmul.f32 %v342, %v406
        %v419 = vmul.f32 %v343, %v406
        %v420 = vmul.f32 %v344, %v406
        %v421 = vmul.f32 %v345, %v406
        %v422 = vmul.f32 %v346, %v406
        %v423 = vadd.f32 %v387, %v407
        %v424 = vadd.f32 %v388, %v408
        %v425 = vadd.f32 %v389, %v409
        %v426 = vadd.f32 %v390, %v410
        %v427 = vadd.f32 %v391, %v411
        %v428 = vadd.f32 %v392, %v412
        %v429 = vadd.f32 %v393, %v413
        %v430 = vadd.f32 %v394, %v414
        %v431 = vadd.f32 %v395, %v415
        %v432 = vadd.f32 %v396, %v416
        %v433 = vadd.f32 %v397, %v417
        %v434 = vadd.f32 %v398, %v418
        %v435 = vadd.f32 %v399, %v419
        %v436 = vadd.f32 %v400, %v420
        %v437 = vadd.f32 %v401, %v421
        %v438 = vadd.f32 %v402, %v422
        %v439 = vld [vmem:[%s285 + $0x1] sm:$0xff]
        %v440 = vld [vmem:[%s285 + $0x9] sm:$0xff]
        %v441 = vld [vmem:[%s285 + $0x19] sm:$0xff]
        %v442 = vld [vmem:[%s285 + $0x21] sm:$0xff]
        %v443 = vld [vmem:[%s285 + $0x31] sm:$0xff]
        %v444 = vld [vmem:[%s285 + $0x39] sm:$0xff]
        %v445 = vld [vmem:[%s285 + $0x49] sm:$0xff]
        %v446 = vld [vmem:[%s285 + $0x51] sm:$0xff]
        %v447 = vld [vmem:[%s285 + $0x61] sm:$0xff]
        %v448 = vld [vmem:[%s285 + $0x69] sm:$0xff]
        %v449 = vld [vmem:[%s285 + $0x79] sm:$0xff]
        %v450 = vld [vmem:[%s285 + $0x81] sm:$0xff]
        %v451 = vld [vmem:[%s285 + $0x91] sm:$0xff]
        %v452 = vld [vmem:[%s285 + $0x99] sm:$0xff]
        %v453 = vld [vmem:[%s285 + $0xa9] sm:$0xff]
        %v454 = vld [vmem:[%s285 + $0xb1] sm:$0xff]
        %v455 = vld [vmem:[%s285 + $0xc1] sm:$0xff]
        %v456 = vld [vmem:[%s285 + $0xc9] sm:$0xff]
        %v457 = vld [vmem:[%s285 + $0xd9] sm:$0xff]
        %v458 = vld [vmem:[%s285 + $0xe1] sm:$0xff]
        %v459 = vlaneseq
        %v460 = vshrl.u32 %v459, 7
        %v461 = vsub.s32 1, %v460
        %v462 = vrot.slane %v308, %v461
        %v463 = vmul.f32 %v439, %v462
        %v464 = vmul.f32 %v440, %v462
        %v465 = vmul.f32 %v441, %v462
        %v466 = vmul.f32 %v442, %v462
        %v467 = vmul.f32 %v443, %v462
        %v468 = vmul.f32 %v444, %v462
        %v469 = vmul.f32 %v445, %v462
        %v470 = vmul.f32 %v446, %v462
        %v471 = vmul.f32 %v447, %v462
        %v472 = vmul.f32 %v448, %v462
        %v473 = vmul.f32 %v449, %v462
        %v474 = vmul.f32 %v450, %v462
        %v475 = vmul.f32 %v451, %v462
        %v476 = vmul.f32 %v452, %v462
        %v477 = vmul.f32 %v453, %v462
        %v478 = vmul.f32 %v454, %v462
        %v479 = vadd.f32 %v423, %v463
        %v480 = vadd.f32 %v424, %v464
        %v481 = vadd.f32 %v425, %v465
        %v482 = vadd.f32 %v426, %v466
        %v483 = vadd.f32 %v427, %v467
        %v484 = vadd.f32 %v428, %v468
        %v485 = vadd.f32 %v429, %v469
        %v486 = vadd.f32 %v430, %v470
        %v487 = vadd.f32 %v431, %v471
        %v488 = vadd.f32 %v432, %v472
        %v489 = vadd.f32 %v433, %v473
        %v490 = vadd.f32 %v434, %v474
        %v491 = vadd.f32 %v435, %v475
        %v492 = vadd.f32 %v436, %v476
        %v493 = vadd.f32 %v437, %v477
        %v494 = vadd.f32 %v438, %v478
        %v495 = vlaneseq
        %v496 = vshrl.u32 %v495, 7
        %v497 = vsub.s32 1, %v496
        %v498 = vrot.slane %v309, %v497
        %v499 = vmul.f32 %v441, %v498
        %v500 = vmul.f32 %v442, %v498
        %v501 = vmul.f32 %v443, %v498
        %v502 = vmul.f32 %v444, %v498
        %v503 = vmul.f32 %v445, %v498
        %v504 = vmul.f32 %v446, %v498
        %v505 = vmul.f32 %v447, %v498
        %v506 = vmul.f32 %v448, %v498
        %v507 = vmul.f32 %v449, %v498
        %v508 = vmul.f32 %v450, %v498
        %v509 = vmul.f32 %v451, %v498
        %v510 = vmul.f32 %v452, %v498
        %v511 = vmul.f32 %v453, %v498
        %v512 = vmul.f32 %v454, %v498
        %v513 = vmul.f32 %v455, %v498
        %v514 = vmul.f32 %v456, %v498
        %v515 = vadd.f32 %v479, %v499
        %v516 = vadd.f32 %v480, %v500
        %v517 = vadd.f32 %v481, %v501
        %v518 = vadd.f32 %v482, %v502
        %v519 = vadd.f32 %v483, %v503
        %v520 = vadd.f32 %v484, %v504
        %v521 = vadd.f32 %v485, %v505
        %v522 = vadd.f32 %v486, %v506
        %v523 = vadd.f32 %v487, %v507
        %v524 = vadd.f32 %v488, %v508
        %v525 = vadd.f32 %v489, %v509
        %v526 = vadd.f32 %v490, %v510
        %v527 = vadd.f32 %v491, %v511
        %v528 = vadd.f32 %v492, %v512
        %v529 = vadd.f32 %v493, %v513
        %v530 = vadd.f32 %v494, %v514
        %v531 = vlaneseq
        %v532 = vshrl.u32 %v531, 7
        %v533 = vsub.s32 1, %v532
        %v534 = vrot.slane %v310, %v533
        %v535 = vmul.f32 %v443, %v534
        %v536 = vmul.f32 %v444, %v534
        %v537 = vmul.f32 %v445, %v534
        %v538 = vmul.f32 %v446, %v534
        %v539 = vmul.f32 %v447, %v534
        %v540 = vmul.f32 %v448, %v534
        %v541 = vmul.f32 %v449, %v534
        %v542 = vmul.f32 %v450, %v534
        %v543 = vmul.f32 %v451, %v534
        %v544 = vmul.f32 %v452, %v534
        %v545 = vmul.f32 %v453, %v534
        %v546 = vmul.f32 %v454, %v534
        %v547 = vmul.f32 %v455, %v534
        %v548 = vmul.f32 %v456, %v534
        %v549 = vmul.f32 %v457, %v534
        %v550 = vmul.f32 %v458, %v534
        %v551 = vadd.f32 %v515, %v535
        %v552 = vadd.f32 %v516, %v536
        %v553 = vadd.f32 %v517, %v537
        %v554 = vadd.f32 %v518, %v538
        %v555 = vadd.f32 %v519, %v539
        %v556 = vadd.f32 %v520, %v540
        %v557 = vadd.f32 %v521, %v541
        %v558 = vadd.f32 %v522, %v542
        %v559 = vadd.f32 %v523, %v543
        %v560 = vadd.f32 %v524, %v544
        %v561 = vadd.f32 %v525, %v545
        %v562 = vadd.f32 %v526, %v546
        %v563 = vadd.f32 %v527, %v547
        %v564 = vadd.f32 %v528, %v548
        %v565 = vadd.f32 %v529, %v549
        %v566 = vadd.f32 %v530, %v550
        %v567 = vld [vmem:[%s285 + $0x2] sm:$0xff]
        %v568 = vld [vmem:[%s285 + $0xa] sm:$0xff]
        %v569 = vld [vmem:[%s285 + $0x1a] sm:$0xff]
        %v570 = vld [vmem:[%s285 + $0x22] sm:$0xff]
        %v571 = vld [vmem:[%s285 + $0x32] sm:$0xff]
        %v572 = vld [vmem:[%s285 + $0x3a] sm:$0xff]
        %v573 = vld [vmem:[%s285 + $0x4a] sm:$0xff]
        %v574 = vld [vmem:[%s285 + $0x52] sm:$0xff]
        %v575 = vld [vmem:[%s285 + $0x62] sm:$0xff]
        %v576 = vld [vmem:[%s285 + $0x6a] sm:$0xff]
        %v577 = vld [vmem:[%s285 + $0x7a] sm:$0xff]
        %v578 = vld [vmem:[%s285 + $0x82] sm:$0xff]
        %v579 = vld [vmem:[%s285 + $0x92] sm:$0xff]
        %v580 = vld [vmem:[%s285 + $0x9a] sm:$0xff]
        %v581 = vld [vmem:[%s285 + $0xaa] sm:$0xff]
        %v582 = vld [vmem:[%s285 + $0xb2] sm:$0xff]
        %v583 = vld [vmem:[%s285 + $0xc2] sm:$0xff]
        %v584 = vld [vmem:[%s285 + $0xca] sm:$0xff]
        %v585 = vld [vmem:[%s285 + $0xda] sm:$0xff]
        %v586 = vld [vmem:[%s285 + $0xe2] sm:$0xff]
        %v587 = vlaneseq
        %v588 = vshrl.u32 %v587, 7
        %v589 = vsub.s32 2, %v588
        %v590 = vrot.slane %v308, %v589
        %v591 = vmul.f32 %v567, %v590
        %v592 = vmul.f32 %v568, %v590
        %v593 = vmul.f32 %v569, %v590
        %v594 = vmul.f32 %v570, %v590
        %v595 = vmul.f32 %v571, %v590
        %v596 = vmul.f32 %v572, %v590
        %v597 = vmul.f32 %v573, %v590
        %v598 = vmul.f32 %v574, %v590
        %v599 = vmul.f32 %v575, %v590
        %v600 = vmul.f32 %v576, %v590
        %v601 = vmul.f32 %v577, %v590
        %v602 = vmul.f32 %v578, %v590
        %v603 = vmul.f32 %v579, %v590
        %v604 = vmul.f32 %v580, %v590
        %v605 = vmul.f32 %v581, %v590
        %v606 = vmul.f32 %v582, %v590
        %v607 = vadd.f32 %v551, %v591
        %v608 = vadd.f32 %v552, %v592
        %v609 = vadd.f32 %v553, %v593
        %v610 = vadd.f32 %v554, %v594
        %v611 = vadd.f32 %v555, %v595
        %v612 = vadd.f32 %v556, %v596
        %v613 = vadd.f32 %v557, %v597
        %v614 = vadd.f32 %v558, %v598
        %v615 = vadd.f32 %v559, %v599
        %v616 = vadd.f32 %v560, %v600
        %v617 = vadd.f32 %v561, %v601
        %v618 = vadd.f32 %v562, %v602
        %v619 = vadd.f32 %v563, %v603
        %v620 = vadd.f32 %v564, %v604
        %v621 = vadd.f32 %v565, %v605
        %v622 = vadd.f32 %v566, %v606
        %v623 = vlaneseq
        %v624 = vshrl.u32 %v623, 7
        %v625 = vsub.s32 2, %v624
        %v626 = vrot.slane %v309, %v625
        %v627 = vmul.f32 %v569, %v626
        %v628 = vmul.f32 %v570, %v626
        %v629 = vmul.f32 %v571, %v626
        %v630 = vmul.f32 %v572, %v626
        %v631 = vmul.f32 %v573, %v626
        %v632 = vmul.f32 %v574, %v626
        %v633 = vmul.f32 %v575, %v626
        %v634 = vmul.f32 %v576, %v626
        %v635 = vmul.f32 %v577, %v626
        %v636 = vmul.f32 %v578, %v626
        %v637 = vmul.f32 %v579, %v626
        %v638 = vmul.f32 %v580, %v626
        %v639 = vmul.f32 %v581, %v626
        %v640 = vmul.f32 %v582, %v626
        %v641 = vmul.f32 %v583, %v626
        %v642 = vmul.f32 %v584, %v626
        %v643 = vadd.f32 %v607, %v627
        %v644 = vadd.f32 %v608, %v628
        %v645 = vadd.f32 %v609, %v629
        %v646 = vadd.f32 %v610, %v630
        %v647 = vadd.f32 %v611, %v631
        %v648 = vadd.f32 %v612, %v632
        %v649 = vadd.f32 %v613, %v633
        %v650 = vadd.f32 %v614, %v634
        %v651 = vadd.f32 %v615, %v635
        %v652 = vadd.f32 %v616, %v636
        %v653 = vadd.f32 %v617, %v637
        %v654 = vadd.f32 %v618, %v638
        %v655 = vadd.f32 %v619, %v639
        %v656 = vadd.f32 %v620, %v640
        %v657 = vadd.f32 %v621, %v641
        %v658 = vadd.f32 %v622, %v642
        %v659 = vlaneseq
        %v660 = vshrl.u32 %v659, 7
        %v661 = vsub.s32 2, %v660
        %v662 = vrot.slane %v310, %v661
        %v663 = vmul.f32 %v571, %v662
        %v664 = vmul.f32 %v572, %v662
        %v665 = vmul.f32 %v573, %v662
        %v666 = vmul.f32 %v574, %v662
        %v667 = vmul.f32 %v575, %v662
        %v668 = vmul.f32 %v576, %v662
        %v669 = vmul.f32 %v577, %v662
        %v670 = vmul.f32 %v578, %v662
        %v671 = vmul.f32 %v579, %v662
        %v672 = vmul.f32 %v580, %v662
        %v673 = vmul.f32 %v581, %v662
        %v674 = vmul.f32 %v582, %v662
        %v675 = vmul.f32 %v583, %v662
        %v676 = vmul.f32 %v584, %v662
        %v677 = vmul.f32 %v585, %v662
        %v678 = vmul.f32 %v586, %v662
        %v679 = vadd.f32 %v643, %v663
        %v680 = vadd.f32 %v644, %v664
        %v681 = vadd.f32 %v645, %v665
        %v682 = vadd.f32 %v646, %v666
        %v683 = vadd.f32 %v647, %v667
        %v684 = vadd.f32 %v648, %v668
        %v685 = vadd.f32 %v649, %v669
        %v686 = vadd.f32 %v650, %v670
        %v687 = vadd.f32 %v651, %v671
        %v688 = vadd.f32 %v652, %v672
        %v689 = vadd.f32 %v653, %v673
        %v690 = vadd.f32 %v654, %v674
        %v691 = vadd.f32 %v655, %v675
        %v692 = vadd.f32 %v656, %v676
        %v693 = vadd.f32 %v657, %v677
        %v694 = vadd.f32 %v658, %v678
        %695 = vmatprep.subr.mxu0 0.0
        %696 = vmatpush1.msra.mxu0 %v311
        %697 = vmatprep.subr.mxu0 0.0
        %698 = vmatpush1.msra.mxu0 %v312
        %699 = vmatprep.subr.mxu0 0.0
        %700 = vmatpush1.msra.mxu0 %v313
        %701 = vmatprep.subr.mxu0 0.0
        %702 = vmatpush1.msra.mxu0 %v314
        %703 = vmatprep.subr.mxu0 0.0
        %704 = vmatpush1.msra.mxu0 %v315
        %705 = vmatprep.subr.mxu0 0.0
        %706 = vmatpush1.msra.mxu0 %v316
        %707 = vmatprep.subr.mxu0 0.0
        %708 = vmatpush1.msra.mxu0 %v317
        %709 = vmatprep.subr.mxu0 0.0
        %710 = vmatpush1.msra.mxu0 %v318
        %711 = vmatprep.subr.mxu0 0.0
        %712 = vmatpush1.msra.mxu0 %v319
        %713 = vmatprep.subr.mxu0 0.0
        %714 = vmatpush1.msra.mxu0 %v320
        %715 = vmatprep.subr.mxu0 0.0
        %716 = vmatpush1.msra.mxu0 %v321
        %717 = vmatprep.subr.mxu0 0.0
        %718 = vmatpush1.msra.mxu0 %v322
        %719 = vmatprep.subr.mxu0 0.0
        %720 = vmatpush1.msra.mxu0 %v323
        %721 = vmatprep.subr.mxu0 0.0
        %722 = vmatpush1.msra.mxu0 %v324
        %723 = vmatprep.subr.mxu0 0.0
        %724 = vmatpush1.msra.mxu0 %v325
        %725 = vmatprep.subr.mxu0 0.0
        %726 = vmatpush1.msra.mxu0 %v326
        %727 = vmatprep.subr.mxu0 0.0
        %728 = vmatpush1.msra.mxu0 0.0
        %729 = vmatprep.subr.mxu0 0.0
        %730 = vmatpush1.msra.mxu0 0.0
        %731 = vmatprep.subr.mxu0 0.0
        %732 = vmatpush1.msra.mxu0 0.0
        %733 = vmatprep.subr.mxu0 0.0
        %734 = vmatpush1.msra.mxu0 0.0
        %735 = vmatprep.subr.mxu0 0.0
        %736 = vmatpush1.msra.mxu0 0.0
        %737 = vmatprep.subr.mxu0 0.0
        %738 = vmatpush1.msra.mxu0 0.0
        %739 = vmatprep.subr.mxu0 0.0
        %740 = vmatpush1.msra.mxu0 0.0
        %741 = vmatprep.subr.mxu0 0.0
        %742 = vmatpush1.msra.mxu0 0.0
        %743 = vmatprep.subr.mxu0 0.0
        %744 = vmatpush1.msra.mxu0 0.0
        %745 = vmatprep.subr.mxu0 0.0
        %746 = vmatpush1.msra.mxu0 0.0
        %747 = vmatprep.subr.mxu0 0.0
        %748 = vmatpush1.msra.mxu0 0.0
        %749 = vmatprep.subr.mxu0 0.0
        %750 = vmatpush1.msra.mxu0 0.0
        %751 = vmatprep.subr.mxu0 0.0
        %752 = vmatpush1.msra.mxu0 0.0
        %753 = vmatprep.subr.mxu0 0.0
        %754 = vmatpush1.msra.mxu0 0.0
        %755 = vmatprep.subr.mxu0 0.0
        %756 = vmatpush1.msra.mxu0 0.0
        %757 = vmatprep.subr.mxu0 0.0
        %758 = vmatpush1.msra.mxu0 0.0
        %759 = vmatprep.mubr.f32.mxu0 0.0
        %760 = vmatmul.mubr.f32.gmra.mrb[0].mxu0 %v679
        %v761 = vpop.f32.mrb[0].mxu0
        %v762 = vadd.f32 0.0, %v761
        %v763 = vpop.f32.mrb[0].mxu0
        %764 = vmatprep.mubr.f32.mxu0 0.0
        %765 = vmatmul.mubr.f32.gmra.mrb[0].mxu0 %v680
        %v766 = vpop.f32.mrb[0].mxu0
        %v767 = vadd.f32 0.0, %v766
        %v768 = vpop.f32.mrb[0].mxu0
        %769 = vmatprep.mubr.f32.mxu0 0.0
        %770 = vmatmul.mubr.f32.gmra.mrb[0].mxu0 %v681
        %v771 = vpop.f32.mrb[0].mxu0
        %v772 = vadd.f32 0.0, %v771
        %v773 = vpop.f32.mrb[0].mxu0
        %774 = vmatprep.mubr.f32.mxu0 0.0
        %775 = vmatmul.mubr.f32.gmra.mrb[0].mxu0 %v682
        %v776 = vpop.f32.mrb[0].mxu0
        %v777 = vadd.f32 0.0, %v776
        %v778 = vpop.f32.mrb[0].mxu0
        %779 = vmatprep.mubr.f32.mxu0 0.0
        %780 = vmatmul.mubr.f32.gmra.mrb[0].mxu0 %v683
        %v781 = vpop.f32.mrb[0].mxu0
        %v782 = vadd.f32 0.0, %v781
        %v783 = vpop.f32.mrb[0].mxu0
        %784 = vmatprep.mubr.f32.mxu0 0.0
        %785 = vmatmul.mubr.f32.gmra.mrb[0].mxu0 %v684
        %v786 = vpop.f32.mrb[0].mxu0
        %v787 = vadd.f32 0.0, %v786
        %v788 = vpop.f32.mrb[0].mxu0
        %789 = vmatprep.mubr.f32.mxu0 0.0
        %790 = vmatmul.mubr.f32.gmra.mrb[0].mxu0 %v685
        %v791 = vpop.f32.mrb[0].mxu0
        %v792 = vadd.f32 0.0, %v791
        %v793 = vpop.f32.mrb[0].mxu0
        %794 = vmatprep.mubr.f32.mxu0 0.0
        %795 = vmatmul.mubr.f32.gmra.mrb[0].mxu0 %v686
        %v796 = vpop.f32.mrb[0].mxu0
        %v797 = vadd.f32 0.0, %v796
        %v798 = vpop.f32.mrb[0].mxu0
        %799 = vmatprep.mubr.f32.mxu0 0.0
        %800 = vmatmul.mubr.f32.gmra.mrb[0].mxu0 %v687
        %v801 = vpop.f32.mrb[0].mxu0
        %v802 = vadd.f32 0.0, %v801
        %v803 = vpop.f32.mrb[0].mxu0
        %804 = vmatprep.mubr.f32.mxu0 0.0
        %805 = vmatmul.mubr.f32.gmra.mrb[0].mxu0 %v688
        %v806 = vpop.f32.mrb[0].mxu0
        %v807 = vadd.f32 0.0, %v806
        %v808 = vpop.f32.mrb[0].mxu0
        %809 = vmatprep.mubr.f32.mxu0 0.0
        %810 = vmatmul.mubr.f32.gmra.mrb[0].mxu0 %v689
        %v811 = vpop.f32.mrb[0].mxu0
        %v812 = vadd.f32 0.0, %v811
        %v813 = vpop.f32.mrb[0].mxu0
        %814 = vmatprep.mubr.f32.mxu0 0.0
        %815 = vmatmul.mubr.f32.gmra.mrb[0].mxu0 %v690
        %v816 = vpop.f32.mrb[0].mxu0
        %v817 = vadd.f32 0.0, %v816
        %v818 = vpop.f32.mrb[0].mxu0
        %819 = vmatprep.mubr.f32.mxu0 0.0
        %820 = vmatmul.mubr.f32.gmra.mrb[0].mxu0 %v691
        %v821 = vpop.f32.mrb[0].mxu0
        %v822 = vadd.f32 0.0, %v821
        %v823 = vpop.f32.mrb[0].mxu0
        %824 = vmatprep.mubr.f32.mxu0 0.0
        %825 = vmatmul.mubr.f32.gmra.mrb[0].mxu0 %v692
        %v826 = vpop.f32.mrb[0].mxu0
        %v827 = vadd.f32 0.0, %v826
        %v828 = vpop.f32.mrb[0].mxu0
        %829 = vmatprep.mubr.f32.mxu0 0.0
        %830 = vmatmul.mubr.f32.gmra.mrb[0].mxu0 %v693
        %v831 = vpop.f32.mrb[0].mxu0
        %v832 = vadd.f32 0.0, %v831
        %v833 = vpop.f32.mrb[0].mxu0
        %834 = vmatprep.mubr.f32.mxu0 0.0
        %835 = vmatmul.mubr.f32.gmra.mrb[0].mxu0 %v694
        %v836 = vpop.f32.mrb[0].mxu0
        %v837 = vadd.f32 0.0, %v836
        %v838 = vpop.f32.mrb[0].mxu0
        %839 = vdwg.mxu0
        %840 = vst [vmem:[%s270] sm:$0xff] %v762
        %841 = vst [vmem:[%s270 + $0x8] sm:$0xff] %v767
        %842 = vst [vmem:[%s270 + $0x10] sm:$0xff] %v772
        %843 = vst [vmem:[%s270 + $0x18] sm:$0xff] %v777
        %844 = vst [vmem:[%s270 + $0x20] sm:$0xff] %v782
        %845 = vst [vmem:[%s270 + $0x28] sm:$0xff] %v787
        %846 = vst [vmem:[%s270 + $0x30] sm:$0xff] %v792
        %847 = vst [vmem:[%s270 + $0x38] sm:$0xff] %v797
        %848 = vst [vmem:[%s270 + $0x40] sm:$0xff] %v802
        %849 = vst [vmem:[%s270 + $0x48] sm:$0xff] %v807
        %850 = vst [vmem:[%s270 + $0x50] sm:$0xff] %v812
        %851 = vst [vmem:[%s270 + $0x58] sm:$0xff] %v817
        %852 = vst [vmem:[%s270 + $0x60] sm:$0xff] %v822
        %853 = vst [vmem:[%s270 + $0x68] sm:$0xff] %v827
        %854 = vst [vmem:[%s270 + $0x70] sm:$0xff] %v832
        %855 = vst [vmem:[%s270 + $0x78] sm:$0xff] %v837
        %s856 = scalar_lea.vmem %s285, 192
        %v857 = vld [vmem:[%s856] sm:$0xff]
        %v858 = vld [vmem:[%s856 + $0x8] sm:$0xff]
        %v859 = vld [vmem:[%s856 + $0x18] sm:$0xff]
        %v860 = vld [vmem:[%s856 + $0x20] sm:$0xff]
        %v861 = vld [vmem:[%s856 + $0x30] sm:$0xff]
        %v862 = vld [vmem:[%s856 + $0x38] sm:$0xff]
        %v863 = vld [vmem:[%s856 + $0x48] sm:$0xff]
        %v864 = vld [vmem:[%s856 + $0x50] sm:$0xff]
        %v865 = vld [vmem:[%s856 + $0x60] sm:$0xff]
        %v866 = vld [vmem:[%s856 + $0x68] sm:$0xff]
        %v867 = vld [vmem:[%s856 + $0x78] sm:$0xff]
        %v868 = vld [vmem:[%s856 + $0x80] sm:$0xff]
        %v869 = vld [vmem:[%s856 + $0x90] sm:$0xff]
        %v870 = vld [vmem:[%s856 + $0x98] sm:$0xff]
        %v871 = vld [vmem:[%s856 + $0xa8] sm:$0xff]
        %v872 = vld [vmem:[%s856 + $0xb0] sm:$0xff]
        %v873 = vld [vmem:[%s303] sm:$0xff]
        %v874 = vld [vmem:[%s303 + $0x8] sm:$0xff]
        %v875 = vld [vmem:[%s303 + $0x18] sm:$0xff]
        %v876 = vld [vmem:[%s303 + $0x20] sm:$0xff]
        %v877 = vmul.f32 %v857, %v350
        %v878 = vmul.f32 %v858, %v350
        %v879 = vmul.f32 %v859, %v350
        %v880 = vmul.f32 %v860, %v350
        %v881 = vmul.f32 %v861, %v350
        %v882 = vmul.f32 %v862, %v350
        %v883 = vmul.f32 %v863, %v350
        %v884 = vmul.f32 %v864, %v350
        %v885 = vmul.f32 %v865, %v350
        %v886 = vmul.f32 %v866, %v350
        %v887 = vmul.f32 %v867, %v350
        %v888 = vmul.f32 %v868, %v350
        %v889 = vmul.f32 %v869, %v350
        %v890 = vmul.f32 %v870, %v350
        %v891 = vmul.f32 %v871, %v350
        %v892 = vmul.f32 %v872, %v350
        %v893 = vmul.f32 %v859, %v370
        %v894 = vmul.f32 %v860, %v370
        %v895 = vmul.f32 %v861, %v370
        %v896 = vmul.f32 %v862, %v370
        %v897 = vmul.f32 %v863, %v370
        %v898 = vmul.f32 %v864, %v370
        %v899 = vmul.f32 %v865, %v370
        %v900 = vmul.f32 %v866, %v370
        %v901 = vmul.f32 %v867, %v370
        %v902 = vmul.f32 %v868, %v370
        %v903 = vmul.f32 %v869, %v370
        %v904 = vmul.f32 %v870, %v370
        %v905 = vmul.f32 %v871, %v370
        %v906 = vmul.f32 %v872, %v370
        %v907 = vmul.f32 %v873, %v370
        %v908 = vmul.f32 %v874, %v370
        %v909 = vadd.f32 %v877, %v893
        %v910 = vadd.f32 %v878, %v894
        %v911 = vadd.f32 %v879, %v895
        %v912 = vadd.f32 %v880, %v896
        %v913 = vadd.f32 %v881, %v897
        %v914 = vadd.f32 %v882, %v898
        %v915 = vadd.f32 %v883, %v899
        %v916 = vadd.f32 %v884, %v900
        %v917 = vadd.f32 %v885, %v901
        %v918 = vadd.f32 %v886, %v902
        %v919 = vadd.f32 %v887, %v903
        %v920 = vadd.f32 %v888, %v904
        %v921 = vadd.f32 %v889, %v905
        %v922 = vadd.f32 %v890, %v906
        %v923 = vadd.f32 %v891, %v907
        %v924 = vadd.f32 %v892, %v908
        %v925 = vmul.f32 %v861, %v406
        %v926 = vmul.f32 %v862, %v406
        %v927 = vmul.f32 %v863, %v406
        %v928 = vmul.f32 %v864, %v406
        %v929 = vmul.f32 %v865, %v406
        %v930 = vmul.f32 %v866, %v406
        %v931 = vmul.f32 %v867, %v406
        %v932 = vmul.f32 %v868, %v406
        %v933 = vmul.f32 %v869, %v406
        %v934 = vmul.f32 %v870, %v406
        %v935 = vmul.f32 %v871, %v406
        %v936 = vmul.f32 %v872, %v406
        %v937 = vmul.f32 %v873, %v406
        %v938 = vmul.f32 %v874, %v406
        %v939 = vmul.f32 %v875, %v406
        %v940 = vmul.f32 %v876, %v406
        %v941 = vadd.f32 %v909, %v925
        %v942 = vadd.f32 %v910, %v926
        %v943 = vadd.f32 %v911, %v927
        %v944 = vadd.f32 %v912, %v928
        %v945 = vadd.f32 %v913, %v929
        %v946 = vadd.f32 %v914, %v930
        %v947 = vadd.f32 %v915, %v931
        %v948 = vadd.f32 %v916, %v932
        %v949 = vadd.f32 %v917, %v933
        %v950 = vadd.f32 %v918, %v934
        %v951 = vadd.f32 %v919, %v935
        %v952 = vadd.f32 %v920, %v936
        %v953 = vadd.f32 %v921, %v937
        %v954 = vadd.f32 %v922, %v938
        %v955 = vadd.f32 %v923, %v939
        %v956 = vadd.f32 %v924, %v940
        %v957 = vld [vmem:[%s856 + $0x1] sm:$0xff]
        %v958 = vld [vmem:[%s856 + $0x9] sm:$0xff]
        %v959 = vld [vmem:[%s856 + $0x19] sm:$0xff]
        %v960 = vld [vmem:[%s856 + $0x21] sm:$0xff]
        %v961 = vld [vmem:[%s856 + $0x31] sm:$0xff]
        %v962 = vld [vmem:[%s856 + $0x39] sm:$0xff]
        %v963 = vld [vmem:[%s856 + $0x49] sm:$0xff]
        %v964 = vld [vmem:[%s856 + $0x51] sm:$0xff]
        %v965 = vld [vmem:[%s856 + $0x61] sm:$0xff]
        %v966 = vld [vmem:[%s856 + $0x69] sm:$0xff]
        %v967 = vld [vmem:[%s856 + $0x79] sm:$0xff]
        %v968 = vld [vmem:[%s856 + $0x81] sm:$0xff]
        %v969 = vld [vmem:[%s856 + $0x91] sm:$0xff]
        %v970 = vld [vmem:[%s856 + $0x99] sm:$0xff]
        %v971 = vld [vmem:[%s856 + $0xa9] sm:$0xff]
        %v972 = vld [vmem:[%s856 + $0xb1] sm:$0xff]
        %v973 = vld [vmem:[%s303 + $0x1] sm:$0xff]
        %v974 = vld [vmem:[%s303 + $0x9] sm:$0xff]
        %v975 = vld [vmem:[%s303 + $0x19] sm:$0xff]
        %v976 = vld [vmem:[%s303 + $0x21] sm:$0xff]
        %v977 = vmul.f32 %v957, %v462
        %v978 = vmul.f32 %v958, %v462
        %v979 = vmul.f32 %v959, %v462
        %v980 = vmul.f32 %v960, %v462
        %v981 = vmul.f32 %v961, %v462
        %v982 = vmul.f32 %v962, %v462
        %v983 = vmul.f32 %v963, %v462
        %v984 = vmul.f32 %v964, %v462
        %v985 = vmul.f32 %v965, %v462
        %v986 = vmul.f32 %v966, %v462
        %v987 = vmul.f32 %v967, %v462
        %v988 = vmul.f32 %v968, %v462
        %v989 = vmul.f32 %v969, %v462
        %v990 = vmul.f32 %v970, %v462
        %v991 = vmul.f32 %v971, %v462
        %v992 = vmul.f32 %v972, %v462
        %v993 = vadd.f32 %v941, %v977
        %v994 = vadd.f32 %v942, %v978
        %v995 = vadd.f32 %v943, %v979
        %v996 = vadd.f32 %v944, %v980
        %v997 = vadd.f32 %v945, %v981
        %v998 = vadd.f32 %v946, %v982
        %v999 = vadd.f32 %v947, %v983
        %v1000 = vadd.f32 %v948, %v984
        %v1001 = vadd.f32 %v949, %v985
        %v1002 = vadd.f32 %v950, %v986
        %v1003 = vadd.f32 %v951, %v987
        %v1004 = vadd.f32 %v952, %v988
        %v1005 = vadd.f32 %v953, %v989
        %v1006 = vadd.f32 %v954, %v990
        %v1007 = vadd.f32 %v955, %v991
        %v1008 = vadd.f32 %v956, %v992
        %v1009 = vmul.f32 %v959, %v498
        %v1010 = vmul.f32 %v960, %v498
        %v1011 = vmul.f32 %v961, %v498
        %v1012 = vmul.f32 %v962, %v498
        %v1013 = vmul.f32 %v963, %v498
        %v1014 = vmul.f32 %v964, %v498
        %v1015 = vmul.f32 %v965, %v498
        %v1016 = vmul.f32 %v966, %v498
        %v1017 = vmul.f32 %v967, %v498
        %v1018 = vmul.f32 %v968, %v498
        %v1019 = vmul.f32 %v969, %v498
        %v1020 = vmul.f32 %v970, %v498
        %v1021 = vmul.f32 %v971, %v498
        %v1022 = vmul.f32 %v972, %v498
        %v1023 = vmul.f32 %v973, %v498
        %v1024 = vmul.f32 %v974, %v498
        %v1025 = vadd.f32 %v993, %v1009
        %v1026 = vadd.f32 %v994, %v1010
        %v1027 = vadd.f32 %v995, %v1011
        %v1028 = vadd.f32 %v996, %v1012
        %v1029 = vadd.f32 %v997, %v1013
        %v1030 = vadd.f32 %v998, %v1014
        %v1031 = vadd.f32 %v999, %v1015
        %v1032 = vadd.f32 %v1000, %v1016
        %v1033 = vadd.f32 %v1001, %v1017
        %v1034 = vadd.f32 %v1002, %v1018
        %v1035 = vadd.f32 %v1003, %v1019
        %v1036 = vadd.f32 %v1004, %v1020
        %v1037 = vadd.f32 %v1005, %v1021
        %v1038 = vadd.f32 %v1006, %v1022
        %v1039 = vadd.f32 %v1007, %v1023
        %v1040 = vadd.f32 %v1008, %v1024
        %v1041 = vmul.f32 %v961, %v534
        %v1042 = vmul.f32 %v962, %v534
        %v1043 = vmul.f32 %v963, %v534
        %v1044 = vmul.f32 %v964, %v534
        %v1045 = vmul.f32 %v965, %v534
        %v1046 = vmul.f32 %v966, %v534
        %v1047 = vmul.f32 %v967, %v534
        %v1048 = vmul.f32 %v968, %v534
        %v1049 = vmul.f32 %v969, %v534
        %v1050 = vmul.f32 %v970, %v534
        %v1051 = vmul.f32 %v971, %v534
        %v1052 = vmul.f32 %v972, %v534
        %v1053 = vmul.f32 %v973, %v534
        %v1054 = vmul.f32 %v974, %v534
        %v1055 = vmul.f32 %v975, %v534
        %v1056 = vmul.f32 %v976, %v534
        %v1057 = vadd.f32 %v1025, %v1041
        %v1058 = vadd.f32 %v1026, %v1042
        %v1059 = vadd.f32 %v1027, %v1043
        %v1060 = vadd.f32 %v1028, %v1044
        %v1061 = vadd.f32 %v1029, %v1045
        %v1062 = vadd.f32 %v1030, %v1046
        %v1063 = vadd.f32 %v1031, %v1047
        %v1064 = vadd.f32 %v1032, %v1048
        %v1065 = vadd.f32 %v1033, %v1049
        %v1066 = vadd.f32 %v1034, %v1050
        %v1067 = vadd.f32 %v1035, %v1051
        %v1068 = vadd.f32 %v1036, %v1052
        %v1069 = vadd.f32 %v1037, %v1053
        %v1070 = vadd.f32 %v1038, %v1054
        %v1071 = vadd.f32 %v1039, %v1055
        %v1072 = vadd.f32 %v1040, %v1056
        %v1073 = vld [vmem:[%s856 + $0x2] sm:$0xff]
        %v1074 = vld [vmem:[%s856 + $0xa] sm:$0xff]
        %v1075 = vld [vmem:[%s856 + $0x1a] sm:$0xff]
        %v1076 = vld [vmem:[%s856 + $0x22] sm:$0xff]
        %v1077 = vld [vmem:[%s856 + $0x32] sm:$0xff]
        %v1078 = vld [vmem:[%s856 + $0x3a] sm:$0xff]
        %v1079 = vld [vmem:[%s856 + $0x4a] sm:$0xff]
        %v1080 = vld [vmem:[%s856 + $0x52] sm:$0xff]
        %v1081 = vld [vmem:[%s856 + $0x62] sm:$0xff]
        %v1082 = vld [vmem:[%s856 + $0x6a] sm:$0xff]
        %v1083 = vld [vmem:[%s856 + $0x7a] sm:$0xff]
        %v1084 = vld [vmem:[%s856 + $0x82] sm:$0xff]
        %v1085 = vld [vmem:[%s856 + $0x92] sm:$0xff]
        %v1086 = vld [vmem:[%s856 + $0x9a] sm:$0xff]
        %v1087 = vld [vmem:[%s856 + $0xaa] sm:$0xff]
        %v1088 = vld [vmem:[%s856 + $0xb2] sm:$0xff]
        %v1089 = vld [vmem:[%s303 + $0x2] sm:$0xff]
        %v1090 = vld [vmem:[%s303 + $0xa] sm:$0xff]
        %v1091 = vld [vmem:[%s303 + $0x1a] sm:$0xff]
        %v1092 = vld [vmem:[%s303 + $0x22] sm:$0xff]
        %v1093 = vmul.f32 %v1073, %v590
        %v1094 = vmul.f32 %v1074, %v590
        %v1095 = vmul.f32 %v1075, %v590
        %v1096 = vmul.f32 %v1076, %v590
        %v1097 = vmul.f32 %v1077, %v590
        %v1098 = vmul.f32 %v1078, %v590
        %v1099 = vmul.f32 %v1079, %v590
        %v1100 = vmul.f32 %v1080, %v590
        %v1101 = vmul.f32 %v1081, %v590
        %v1102 = vmul.f32 %v1082, %v590
        %v1103 = vmul.f32 %v1083, %v590
        %v1104 = vmul.f32 %v1084, %v590
        %v1105 = vmul.f32 %v1085, %v590
        %v1106 = vmul.f32 %v1086, %v590
        %v1107 = vmul.f32 %v1087, %v590
        %v1108 = vmul.f32 %v1088, %v590
        %v1109 = vadd.f32 %v1057, %v1093
        %v1110 = vadd.f32 %v1058, %v1094
        %v1111 = vadd.f32 %v1059, %v1095
        %v1112 = vadd.f32 %v1060, %v1096
        %v1113 = vadd.f32 %v1061, %v1097
        %v1114 = vadd.f32 %v1062, %v1098
        %v1115 = vadd.f32 %v1063, %v1099
        %v1116 = vadd.f32 %v1064, %v1100
        %v1117 = vadd.f32 %v1065, %v1101
        %v1118 = vadd.f32 %v1066, %v1102
        %v1119 = vadd.f32 %v1067, %v1103
        %v1120 = vadd.f32 %v1068, %v1104
        %v1121 = vadd.f32 %v1069, %v1105
        %v1122 = vadd.f32 %v1070, %v1106
        %v1123 = vadd.f32 %v1071, %v1107
        %v1124 = vadd.f32 %v1072, %v1108
        %v1125 = vmul.f32 %v1075, %v626
        %v1126 = vmul.f32 %v1076, %v626
        %v1127 = vmul.f32 %v1077, %v626
        %v1128 = vmul.f32 %v1078, %v626
        %v1129 = vmul.f32 %v1079, %v626
        %v1130 = vmul.f32 %v1080, %v626
        %v1131 = vmul.f32 %v1081, %v626
        %v1132 = vmul.f32 %v1082, %v626
        %v1133 = vmul.f32 %v1083, %v626
        %v1134 = vmul.f32 %v1084, %v626
        %v1135 = vmul.f32 %v1085, %v626
        %v1136 = vmul.f32 %v1086, %v626
        %v1137 = vmul.f32 %v1087, %v626
        %v1138 = vmul.f32 %v1088, %v626
        %v1139 = vmul.f32 %v1089, %v626
        %v1140 = vmul.f32 %v1090, %v626
        %v1141 = vadd.f32 %v1109, %v1125
        %v1142 = vadd.f32 %v1110, %v1126
        %v1143 = vadd.f32 %v1111, %v1127
        %v1144 = vadd.f32 %v1112, %v1128
        %v1145 = vadd.f32 %v1113, %v1129
        %v1146 = vadd.f32 %v1114, %v1130
        %v1147 = vadd.f32 %v1115, %v1131
        %v1148 = vadd.f32 %v1116, %v1132
        %v1149 = vadd.f32 %v1117, %v1133
        %v1150 = vadd.f32 %v1118, %v1134
        %v1151 = vadd.f32 %v1119, %v1135
        %v1152 = vadd.f32 %v1120, %v1136
        %v1153 = vadd.f32 %v1121, %v1137
        %v1154 = vadd.f32 %v1122, %v1138
        %v1155 = vadd.f32 %v1123, %v1139
        %v1156 = vadd.f32 %v1124, %v1140
        %v1157 = vmul.f32 %v1077, %v662
        %v1158 = vmul.f32 %v1078, %v662
        %v1159 = vmul.f32 %v1079, %v662
        %v1160 = vmul.f32 %v1080, %v662
        %v1161 = vmul.f32 %v1081, %v662
        %v1162 = vmul.f32 %v1082, %v662
        %v1163 = vmul.f32 %v1083, %v662
        %v1164 = vmul.f32 %v1084, %v662
        %v1165 = vmul.f32 %v1085, %v662
        %v1166 = vmul.f32 %v1086, %v662
        %v1167 = vmul.f32 %v1087, %v662
        %v1168 = vmul.f32 %v1088, %v662
        %v1169 = vmul.f32 %v1089, %v662
        %v1170 = vmul.f32 %v1090, %v662
        %v1171 = vmul.f32 %v1091, %v662
        %v1172 = vmul.f32 %v1092, %v662
        %v1173 = vadd.f32 %v1141, %v1157
        %v1174 = vadd.f32 %v1142, %v1158
        %v1175 = vadd.f32 %v1143, %v1159
        %v1176 = vadd.f32 %v1144, %v1160
        %v1177 = vadd.f32 %v1145, %v1161
        %v1178 = vadd.f32 %v1146, %v1162
        %v1179 = vadd.f32 %v1147, %v1163
        %v1180 = vadd.f32 %v1148, %v1164
        %v1181 = vadd.f32 %v1149, %v1165
        %v1182 = vadd.f32 %v1150, %v1166
        %v1183 = vadd.f32 %v1151, %v1167
        %v1184 = vadd.f32 %v1152, %v1168
        %v1185 = vadd.f32 %v1153, %v1169
        %v1186 = vadd.f32 %v1154, %v1170
        %v1187 = vadd.f32 %v1155, %v1171
        %v1188 = vadd.f32 %v1156, %v1172
        %1189 = vmatprep.subr.mxu0 0.0
        %1190 = vmatpush1.msra.mxu0 %v311
        %1191 = vmatprep.subr.mxu0 0.0
        %1192 = vmatpush1.msra.mxu0 %v312
        %1193 = vmatprep.subr.mxu0 0.0
        %1194 = vmatpush1.msra.mxu0 %v313
        %1195 = vmatprep.subr.mxu0 0.0
        %1196 = vmatpush1.msra.mxu0 %v314
        %1197 = vmatprep.subr.mxu0 0.0
        %1198 = vmatpush1.msra.mxu0 %v315
        %1199 = vmatprep.subr.mxu0 0.0
        %1200 = vmatpush1.msra.mxu0 %v316
        %1201 = vmatprep.subr.mxu0 0.0
        %1202 = vmatpush1.msra.mxu0 %v317
        %1203 = vmatprep.subr.mxu0 0.0
        %1204 = vmatpush1.msra.mxu0 %v318
        %1205 = vmatprep.subr.mxu0 0.0
        %1206 = vmatpush1.msra.mxu0 %v319
        %1207 = vmatprep.subr.mxu0 0.0
        %1208 = vmatpush1.msra.mxu0 %v320
        %1209 = vmatprep.subr.mxu0 0.0
        %1210 = vmatpush1.msra.mxu0 %v321
        %1211 = vmatprep.subr.mxu0 0.0
        %1212 = vmatpush1.msra.mxu0 %v322
        %1213 = vmatprep.subr.mxu0 0.0
        %1214 = vmatpush1.msra.mxu0 %v323
        %1215 = vmatprep.subr.mxu0 0.0
        %1216 = vmatpush1.msra.mxu0 %v324
        %1217 = vmatprep.subr.mxu0 0.0
        %1218 = vmatpush1.msra.mxu0 %v325
        %1219 = vmatprep.subr.mxu0 0.0
        %1220 = vmatpush1.msra.mxu0 %v326
        %1221 = vmatprep.subr.mxu0 0.0
        %1222 = vmatpush1.msra.mxu0 0.0
        %1223 = vmatprep.subr.mxu0 0.0
        %1224 = vmatpush1.msra.mxu0 0.0
        %1225 = vmatprep.subr.mxu0 0.0
        %1226 = vmatpush1.msra.mxu0 0.0
        %1227 = vmatprep.subr.mxu0 0.0
        %1228 = vmatpush1.msra.mxu0 0.0
        %1229 = vmatprep.subr.mxu0 0.0
        %1230 = vmatpush1.msra.mxu0 0.0
        %1231 = vmatprep.subr.mxu0 0.0
        %1232 = vmatpush1.msra.mxu0 0.0
        %1233 = vmatprep.subr.mxu0 0.0
        %1234 = vmatpush1.msra.mxu0 0.0
        %1235 = vmatprep.subr.mxu0 0.0
        %1236 = vmatpush1.msra.mxu0 0.0
        %1237 = vmatprep.subr.mxu0 0.0
        %1238 = vmatpush1.msra.mxu0 0.0
        %1239 = vmatprep.subr.mxu0 0.0
        %1240 = vmatpush1.msra.mxu0 0.0
        %1241 = vmatprep.subr.mxu0 0.0
        %1242 = vmatpush1.msra.mxu0 0.0
        %1243 = vmatprep.subr.mxu0 0.0
        %1244 = vmatpush1.msra.mxu0 0.0
        %1245 = vmatprep.subr.mxu0 0.0
        %1246 = vmatpush1.msra.mxu0 0.0
        %1247 = vmatprep.subr.mxu0 0.0
        %1248 = vmatpush1.msra.mxu0 0.0
        %1249 = vmatprep.subr.mxu0 0.0
        %1250 = vmatpush1.msra.mxu0 0.0
        %1251 = vmatprep.subr.mxu0 0.0
        %1252 = vmatpush1.msra.mxu0 0.0
        %1253 = vmatprep.mubr.f32.mxu0 0.0
        %1254 = vmatmul.mubr.f32.gmra.mrb[0].mxu0 %v1173
        %v1255 = vpop.f32.mrb[0].mxu0
        %v1256 = vadd.f32 0.0, %v1255
        %v1257 = vpop.f32.mrb[0].mxu0
        %1258 = vmatprep.mubr.f32.mxu0 0.0
        %1259 = vmatmul.mubr.f32.gmra.mrb[0].mxu0 %v1174
        %v1260 = vpop.f32.mrb[0].mxu0
        %v1261 = vadd.f32 0.0, %v1260
        %v1262 = vpop.f32.mrb[0].mxu0
        %1263 = vmatprep.mubr.f32.mxu0 0.0
        %1264 = vmatmul.mubr.f32.gmra.mrb[0].mxu0 %v1175
        %v1265 = vpop.f32.mrb[0].mxu0
        %v1266 = vadd.f32 0.0, %v1265
        %v1267 = vpop.f32.mrb[0].mxu0
        %1268 = vmatprep.mubr.f32.mxu0 0.0
        %1269 = vmatmul.mubr.f32.gmra.mrb[0].mxu0 %v1176
        %v1270 = vpop.f32.mrb[0].mxu0
        %v1271 = vadd.f32 0.0, %v1270
        %v1272 = vpop.f32.mrb[0].mxu0
        %1273 = vmatprep.mubr.f32.mxu0 0.0
        %1274 = vmatmul.mubr.f32.gmra.mrb[0].mxu0 %v1177
        %v1275 = vpop.f32.mrb[0].mxu0
        %v1276 = vadd.f32 0.0, %v1275
        %v1277 = vpop.f32.mrb[0].mxu0
        %1278 = vmatprep.mubr.f32.mxu0 0.0
        %1279 = vmatmul.mubr.f32.gmra.mrb[0].mxu0 %v1178
        %v1280 = vpop.f32.mrb[0].mxu0
        %v1281 = vadd.f32 0.0, %v1280
        %v1282 = vpop.f32.mrb[0].mxu0
        %1283 = vmatprep.mubr.f32.mxu0 0.0
        %1284 = vmatmul.mubr.f32.gmra.mrb[0].mxu0 %v1179
        %v1285 = vpop.f32.mrb[0].mxu0
        %v1286 = vadd.f32 0.0, %v1285
        %v1287 = vpop.f32.mrb[0].mxu0
        %1288 = vmatprep.mubr.f32.mxu0 0.0
        %1289 = vmatmul.mubr.f32.gmra.mrb[0].mxu0 %v1180
        %v1290 = vpop.f32.mrb[0].mxu0
        %v1291 = vadd.f32 0.0, %v1290
        %v1292 = vpop.f32.mrb[0].mxu0
        %1293 = vmatprep.mubr.f32.mxu0 0.0
        %1294 = vmatmul.mubr.f32.gmra.mrb[0].mxu0 %v1181
        %v1295 = vpop.f32.mrb[0].mxu0
        %v1296 = vadd.f32 0.0, %v1295
        %v1297 = vpop.f32.mrb[0].mxu0
        %1298 = vmatprep.mubr.f32.mxu0 0.0
        %1299 = vmatmul.mubr.f32.gmra.mrb[0].mxu0 %v1182
        %v1300 = vpop.f32.mrb[0].mxu0
        %v1301 = vadd.f32 0.0, %v1300
        %v1302 = vpop.f32.mrb[0].mxu0
        %1303 = vmatprep.mubr.f32.mxu0 0.0
        %1304 = vmatmul.mubr.f32.gmra.mrb[0].mxu0 %v1183
        %v1305 = vpop.f32.mrb[0].mxu0
        %v1306 = vadd.f32 0.0, %v1305
        %v1307 = vpop.f32.mrb[0].mxu0
        %1308 = vmatprep.mubr.f32.mxu0 0.0
        %1309 = vmatmul.mubr.f32.gmra.mrb[0].mxu0 %v1184
        %v1310 = vpop.f32.mrb[0].mxu0
        %v1311 = vadd.f32 0.0, %v1310
        %v1312 = vpop.f32.mrb[0].mxu0
        %1313 = vmatprep.mubr.f32.mxu0 0.0
        %1314 = vmatmul.mubr.f32.gmra.mrb[0].mxu0 %v1185
        %v1315 = vpop.f32.mrb[0].mxu0
        %v1316 = vadd.f32 0.0, %v1315
        %v1317 = vpop.f32.mrb[0].mxu0
        %1318 = vmatprep.mubr.f32.mxu0 0.0
        %1319 = vmatmul.mubr.f32.gmra.mrb[0].mxu0 %v1186
        %v1320 = vpop.f32.mrb[0].mxu0
        %v1321 = vadd.f32 0.0, %v1320
        %v1322 = vpop.f32.mrb[0].mxu0
        %1323 = vmatprep.mubr.f32.mxu0 0.0
        %1324 = vmatmul.mubr.f32.gmra.mrb[0].mxu0 %v1187
        %v1325 = vpop.f32.mrb[0].mxu0
        %v1326 = vadd.f32 0.0, %v1325
        %v1327 = vpop.f32.mrb[0].mxu0
        %1328 = vmatprep.mubr.f32.mxu0 0.0
        %1329 = vmatmul.mubr.f32.gmra.mrb[0].mxu0 %v1188
        %v1330 = vpop.f32.mrb[0].mxu0
        %v1331 = vadd.f32 0.0, %v1330
        %v1332 = vpop.f32.mrb[0].mxu0
        %1333 = vdwg.mxu0
        %s1334 = scalar_lea.vmem %s270, 128 [#allocation2]
        %1335 = vst [vmem:[%s1334] sm:$0xff] %v1256
        %1336 = vst [vmem:[%s1334 + $0x8] sm:$0xff] %v1261
        %1337 = vst [vmem:[%s1334 + $0x10] sm:$0xff] %v1266
        %1338 = vst [vmem:[%s1334 + $0x18] sm:$0xff] %v1271
        %1339 = vst [vmem:[%s1334 + $0x20] sm:$0xff] %v1276
        %1340 = vst [vmem:[%s1334 + $0x28] sm:$0xff] %v1281
        %1341 = vst [vmem:[%s1334 + $0x30] sm:$0xff] %v1286
        %1342 = vst [vmem:[%s1334 + $0x38] sm:$0xff] %v1291
        %1343 = vst [vmem:[%s1334 + $0x40] sm:$0xff] %v1296
        %1344 = vst [vmem:[%s1334 + $0x48] sm:$0xff] %v1301
        %1345 = vst [vmem:[%s1334 + $0x50] sm:$0xff] %v1306
        %1346 = vst [vmem:[%s1334 + $0x58] sm:$0xff] %v1311
        %1347 = vst [vmem:[%s1334 + $0x60] sm:$0xff] %v1316
        %1348 = vst [vmem:[%s1334 + $0x68] sm:$0xff] %v1321
        %1349 = vst [vmem:[%s1334 + $0x70] sm:$0xff] %v1326
        %1350 = vst [vmem:[%s1334 + $0x78] sm:$0xff] %v1331
        %s1351 = sand.u32 %s142, 1
        %s1352 = scalar_lea.sflag [#allocation3], %s1351
        %s1353 = sand.u32 %s142, 1
        %s1354 = smul.addr %s1353, 256
        %s1355 = scalar_lea.vmem [#allocation2], %s1354
        // Predicated region
        $region37: #{tpu_custom_call.1} parent=35 // pred_check
          %p1356 = pneg %p152
        $region38: #{tpu_custom_call.1} parent=35 // pred_check_branch
          %1358 = sbr.rel (%p1356) target = $region40
        $region39: #{tpu_custom_call.1} parent=35 // pred_region
          %s1359 = smul.u32 16, %s23
          %s1361 = ssub.s32 4096, 4096
          %1362 = vsyncadd %s1352, %s1361
          %s1363 = smul.addr %s1359, 2
          %s1364 = smul.addr %s22, 32
          %s1365 = sadd.s32 %s1363, %s1364
          %s1366 = smul.addr %s1365, 128
          %s1367 = scalar_lea.hbm %s4, %s1366
          %s1368 = sshll.u32 %s1355, 4
          %s1369 = int_to_ptr.vmem [resolvable:$true] %s1368
          %1374 = dma.vmem_to_hbm [thread:$0]  %s1369, 4096, %s1367, %s1352, 128, 128, 8
        $region40: #{tpu_custom_call.1} parent=35 // pred_fallthru
          _
      $region36: #{tpu_custom_call.1} parent=5 // pred_fallthru
        _
      %p1375 = scmp.le.s32.totalorder 2, %s13
      // Predicated region
      $region41: #{tpu_custom_call.1} parent=5 // pred_check
        %p1376 = pneg %p1375
      $region42: #{tpu_custom_call.1} parent=5 // pred_check_branch
        %1378 = sbr.rel (%p1376) target = $region44
      $region43: #{tpu_custom_call.1} parent=5 // pred_region
        %s1379 = ssub.s32 %s13, 2
        // Predicated region
        $region45: #{tpu_custom_call.1} parent=43 // pred_check
          %p1380 = pneg %p158
        $region46: #{tpu_custom_call.1} parent=43 // pred_check_branch
          %1382 = sbr.rel (%p1380) target = $region48
        $region47: #{tpu_custom_call.1} parent=43 // pred_region
          %s1383 = sand.u32 %s143, 1
          %s1384 = scalar_lea.sflag [#allocation3], %s1383
          %s1385 = sand.u32 %s143, 1
          %s1386 = smul.addr %s1385, 256
          %s1387 = scalar_lea.vmem [#allocation2], %s1386
          %1388 = dma.done %s1384, 4096
        $region48: #{tpu_custom_call.1} parent=43 // pred_fallthru
          _
      $region44: #{tpu_custom_call.1} parent=5 // pred_fallthru
        _
    $region6: #{tpu_custom_call.1} parent=1 // loop_footer
      %s17 = sadd.s32 1, %s13
    $region7: #{tpu_custom_call.1} parent=1 // loop_footer_branch
      %12 = sbr.rel target = $region3
    $region8: #{tpu_custom_call.1} parent=1 // loop_exit
      _
    %1389 = vsyncpa [#allocation3], 1
    %s1390 = scalar_lea.sflag [#allocation3], 1
    %1391 = vsyncpa %s1390, 1

</llo_original>
